<compile_context>
chip_gen: v7x
topology: tpu7x:2x2x1
jax: 0.10.0
libtpu: 0.0.40
codegen_flags: <defaults>
</compile_context>

<pallas_src>
import functools
import math
import numpy as np

import jax
import jax.numpy as jnp
from jax.experimental import pallas as pl
from jax.experimental.pallas import tpu as pltpu


# ----------------------------------------------------------------------------
# Deterministic spherical-harmonic transform matrices (host-side numpy glue)
# ----------------------------------------------------------------------------
def _assoc_legendre(l, m, x):
    """P_l^m(x) for m >= 0 (Condon-Shortley phase), vectorized over x."""
    pmm = np.ones_like(x)
    if m > 0:
        somx2 = np.sqrt((1.0 - x) * (1.0 + x))
        fact = 1.0
        for _ in range(m):
            pmm = -pmm * fact * somx2
            fact += 2.0
    if l == m:
        return pmm
    pmmp1 = x * (2 * m + 1) * pmm
    if l == m + 1:
        return pmmp1
    pll = pmmp1
    for ll in range(m + 2, l + 1):
        pll = ((2 * ll - 1) * x * pmmp1 - (ll + m - 1) * pmm) / (ll - m)
        pmm = pmmp1
        pmmp1 = pll
    return pll


def _sph_harm(l, m, theta, phi):
    am = abs(m)
    norm = math.sqrt((2 * l + 1) / (4 * math.pi)
                     * math.factorial(l - am) / math.factorial(l + am))
    P = _assoc_legendre(l, am, np.cos(theta))
    Y = norm * P * np.exp(1j * am * phi)
    if m < 0:
        Y = ((-1) ** am) * np.conj(Y)
    return Y


def build_sht_matrices(L):
    """Returns synthesis Y (K_spatial, K_lm) and analysis F = pinv(Y)."""
    M = 2 * L - 1
    K = L * M
    thetas = (2 * np.arange(L) + 1) * np.pi / (2 * L - 1)   # MW theta samples
    phis = 2 * np.pi * np.arange(M) / (2 * L - 1)           # MW phi samples
    TT, PP = np.meshgrid(thetas, phis, indexing="ij")        # (L, M)
    Y = np.zeros((K, K), dtype=np.complex128)
    for l in range(L):
        for m in range(-l, l + 1):
            col = l * M + (m + L - 1)
            Y[:, col] = _sph_harm(l, m, TT, PP).reshape(-1)
    F = np.linalg.pinv(Y)
    return Y.astype(np.complex64), F.astype(np.complex64)


# ----------------------------------------------------------------------------
# Pallas kernel
# ----------------------------------------------------------------------------
def smha_kernel(f_ref, kq_ref, kk_ref, kv_ref, ko_ref, sht_hbm, out_ref,
                sht_vmem, sht_sem, *, k_true):
    h = pl.program_id(2)                      # head index inside this group

    # First head of every (group, batch-tile): zero the resident output slab
    # and DMA the constant SHT matrices into the single-buffered VMEM scratch.
    # The head axis is the innermost ("arbitrary") axis, so h == 0 is the
    # first step executed by every core regardless of how the two leading
    # "parallel" axes are sharded across TensorCores.
    @pl.when(h == 0)
    def _():
        cp = pltpu.make_async_copy(sht_hbm, sht_vmem, sht_sem)
        cp.start()
        cp.wait()
        out_ref[...] = jnp.zeros_like(out_ref)

    fr = f_ref[0, 0]                          # (Bb, Cd, Kp) f32
    fi = f_ref[1, 0]
    Bb, Cd, Kp = fr.shape

    def chan_mix(w_ref):
        # F[b,d,k] = sum_c f[b,c,k] * w[c,d,k]   (complex, elementwise in k)
        # Unrolled FMA over c keeps temporaries at (Bb, Cd, Kp) instead of
        # materializing (Bb, Cd, Cd, Kp) broadcast products.
        wr = w_ref[0, 0]                      # (Cd, Cd, Kp)
        wi = w_ref[1, 0]
        Fr = jnp.zeros((Bb, Cd, Kp), jnp.float32)
        Fi = jnp.zeros((Bb, Cd, Kp), jnp.float32)
        for c in range(Cd):
            frc = fr[:, c:c + 1, :]           # (Bb, 1, Kp)
            fic = fi[:, c:c + 1, :]
            wrc = wr[c][None]                 # (1, Cd, Kp)
            wic = wi[c][None]
            Fr = Fr + frc * wrc - fic * wic
            Fi = Fi + frc * wic + fic * wrc
        return Fr, Fi

    FQr, FQi = chan_mix(kq_ref)
    FKr, FKi = chan_mix(kk_ref)
    FVr, FVi = chan_mix(kv_ref)

    # F_A_raw = F_Q * conj(F_K)   (complex elementwise, f32 VPU)
    FAr = (FQr * FKr + FQi * FKi).reshape(Bb * Cd, Kp)
    FAi = (FQi * FKr - FQr * FKi).reshape(Bb * Cd, Kp)

    dot = lambda a, b: jnp.dot(a, b, preferred_element_type=jnp.float32)

    # Inverse SHT (softmax logits): separate Re/Im dots (no lane concat /
    # slice relayouts).  A hi/lo bf16 split of the FA operand gives ~f32
    # accuracy at bf16 MXU rate.
    def hi_lo(x):
        hi = x.astype(jnp.bfloat16)
        lo = (x - hi.astype(jnp.float32)).astype(jnp.bfloat16)
        return hi, lo

    FAr_hi, FAr_lo = hi_lo(FAr)
    FAi_hi, FAi_lo = hi_lo(FAi)
    inv_re = sht_vmem[0]                      # Re(Y)^T  (Kp, Kp) bf16
    inv_im = sht_vmem[1]                      # Im(Y)^T
    a_sp = (dot(FAr_hi, inv_re) + dot(FAr_lo, inv_re)
            - dot(FAi_hi, inv_im) - dot(FAi_lo, inv_im))   # (Bb*Cd, Kp) f32

    # Masked softmax over the true (unpadded) spatial positions.  The masked
    # tail underflows to exactly 0 in exp, so no second select is needed.
    col = jax.lax.broadcasted_iota(jnp.int32, a_sp.shape, 1)
    logits = jnp.where(col < k_true, a_sp, -1e30)
    mx = jnp.max(logits, axis=-1, keepdims=True)
    e = jnp.exp(logits - mx)
    denom = jnp.sum(e, axis=-1, keepdims=True)
    a_soft = e * pl.reciprocal(denom, approx=True)          # (Bb*Cd, Kp)

    # Forward SHT: a_soft in [0, 1] -> single bf16 pass per Re/Im plane.
    a_bf = a_soft.astype(jnp.bfloat16)
    fwd_re = sht_vmem[2]                      # Re(F)^T
    fwd_im = sht_vmem[3]                      # Im(F)^T
    FAr_lm = dot(a_bf, fwd_re)                # (Bb*Cd, Kp) f32
    FAi_lm = dot(a_bf, fwd_im)

    # F_fout = F_V * F_A   (complex elementwise)
    FVr2 = FVr.reshape(Bb * Cd, Kp)
    FVi2 = FVi.reshape(Bb * Cd, Kp)
    Foutr = (FVr2 * FAr_lm - FVi2 * FAi_lm).reshape(Bb, Cd, Kp)
    Fouti = (FVr2 * FAi_lm + FVi2 * FAr_lm).reshape(Bb, Cd, Kp)

    # Output projection: out[b,o,k] += sum_d Fout[b,d,k] * k_o[o,d,k],
    # unrolled over d with bounded (Bb, O, Kp) temporaries.
    kor = ko_ref[0, 0]                        # (O, Cd, Kp)
    koi = ko_ref[1, 0]
    O = kor.shape[0]
    cr = jnp.zeros((Bb, O, Kp), jnp.float32)
    ci = jnp.zeros((Bb, O, Kp), jnp.float32)
    for d in range(Cd):
        Frd = Foutr[:, d:d + 1, :]            # (Bb, 1, Kp)
        Fid = Fouti[:, d:d + 1, :]
        wrd = kor[:, d, :][None]              # (1, O, Kp)
        wid = koi[:, d, :][None]
        cr = cr + Frd * wrd - Fid * wid
        ci = ci + Frd * wid + Fid * wrd

    # In-place accumulation into the resident output slab (no stack copy).
    # NOTE: correctness requires the head axis to stay the LAST grid axis.
    out_ref[0, 0] += cr
    out_ref[0, 1] += ci


def _vmem_cap_bytes():
    # v7x has 64 MiB VMEM/core (leave headroom for Mosaic scratch and
    # in-kernel temporaries); v5e / v6e have 128 MiB.
    try:
        kind = jax.devices()[0].device_kind.lower()
    except Exception:
        kind = ""
    return (56 << 20) if "v7" in kind else (100 << 20)


def spherical_mha_pallas(f_ri, kq_ri, kk_ri, kv_ri, ko_ri, sht_mats, k_true):
    _, H, B, Cd, Kp = f_ri.shape
    O = ko_ri.shape[2]

    # Batch-tile split only when each tile still feeds the MXU >= 128 rows.
    # Otherwise a split just duplicates weight/matrix DMAs, doubles per-step
    # overhead and halves the already-tiny MXU M.
    mxu_rows = 128
    num_b_tiles = 2 if (B % 2 == 0 and (B // 2) * Cd >= mxu_rows) else 1
    b_blk = B // num_b_tiles

    # When the batch cannot be split, shard the HEAD axis into two parallel
    # groups so v7x's two TensorCores both get work; each group writes its
    # own partial output slab, summed afterwards by a trailing XLA add.
    num_groups = 2 if (num_b_tiles == 1 and H % 2 == 0) else 1
    hpg = H // num_groups

    kernel = functools.partial(smha_kernel, k_true=k_true)

    f_spec = pl.BlockSpec((2, 1, b_blk, Cd, Kp),
                          lambda g, bi, h: (0, g * hpg + h, bi, 0, 0))
    w_spec = pl.BlockSpec((2, 1, Cd, Cd, Kp),
                          lambda g, bi, h: (0, g * hpg + h, 0, 0, 0))
    ko_spec = pl.BlockSpec((2, 1, O, Cd, Kp),
                           lambda g, bi, h: (0, g * hpg + h, 0, 0, 0))
    sht_spec = pl.BlockSpec(memory_space=pl.ANY)   # single-buffered via scratch
    out_spec = pl.BlockSpec((1, 2, b_blk, O, Kp),
                            lambda g, bi, h: (g, 0, bi, 0, 0))

    # VMEM budget: double-buffered input blocks + resident output slab +
    # single-buffered SHT scratch + elementwise temporaries, clamped per chip.
    in_bytes = (2 * b_blk * Cd * Kp * 4            # f block
                + 3 * 2 * Cd * Cd * Kp * 4         # k_q / k_k / k_v blocks
                + 2 * O * Cd * Kp * 4)             # k_o block
    sht_bytes = 4 * Kp * Kp * 2                    # bf16, single buffer
    out_bytes = 2 * b_blk * O * Kp * 4
    tmp_bytes = 32 * b_blk * Cd * Kp * 4           # in-kernel temporaries (est.)
    need = 2 * in_bytes + sht_bytes + 2 * out_bytes + tmp_bytes
    vmem_limit = int(min(_vmem_cap_bytes(), max(32 << 20, 2 * need)))

    steps = num_groups * num_b_tiles * hpg
    mm_flops = 2 * (b_blk * Cd) * Kp * Kp * 6      # 4 inverse + 2 forward dots
    vpu_flops = 8 * b_blk * Cd * Kp * (4 * Cd + 6) + 8 * b_blk * O * Cd * Kp
    cost = pl.CostEstimate(
        flops=int(steps * (mm_flops + vpu_flops)),
        transcendentals=int(steps * b_blk * Cd * Kp),
        bytes_accessed=int(4 * (f_ri.size + kq_ri.size + kk_ri.size
                                + kv_ri.size + ko_ri.size)
                           + 2 * sht_mats.size
                           + 4 * num_groups * 2 * B * O * Kp))

    grid_spec = pltpu.PrefetchScalarGridSpec(
        num_scalar_prefetch=0,
        grid=(num_groups, num_b_tiles, hpg),
        in_specs=[f_spec, w_spec, w_spec, w_spec, ko_spec, sht_spec],
        out_specs=out_spec,
        scratch_shapes=[pltpu.VMEM((4, Kp, Kp), jnp.bfloat16),
                        pltpu.SemaphoreType.DMA(())],
    )

    partial_out = pl.pallas_call(
        kernel,
        out_shape=jax.ShapeDtypeStruct((num_groups, 2, B, O, Kp), jnp.float32),
        grid_spec=grid_spec,
        compiler_params=pltpu.CompilerParams(
            dimension_semantics=("parallel", "parallel", "arbitrary"),
            vmem_limit_bytes=vmem_limit),
        cost_estimate=cost,
    )(f_ri, kq_ri, kk_ri, kv_ri, ko_ri, sht_mats)

    # Combine head-group partial slabs (no-op copy when num_groups == 1).
    return jnp.sum(partial_out, axis=0)


# ----------------------------------------------------------------------------
# Pure numpy reference (same math, same SHT matrices)
# ----------------------------------------------------------------------------
def reference_numpy(f_in, kq_lm, kk_lm, kv_lm, ko_lm, Y, F, H, Cd, L):
    M = 2 * L - 1
    K = L * M
    B = f_in.shape[0]
    f = f_in.reshape(B, H, Cd, K)
    outs = []
    for h in range(H):
        fh = f[:, h]
        FQ = np.einsum("bck,cdk->bdk", fh, kq_lm[h])
        FK = np.einsum("bck,cdk->bdk", fh, kk_lm[h])
        FV = np.einsum("bck,cdk->bdk", fh, kv_lm[h])
        FA_raw = FQ * np.conj(FK)
        A_sp = np.real(np.einsum("sk,bdk->bds", Y, FA_raw))
        A_flat = A_sp.reshape(B, Cd, -1)
        A_flat = A_flat - A_flat.max(-1, keepdims=True)
        e = np.exp(A_flat)
        A_soft = (e / e.sum(-1, keepdims=True)).reshape(A_sp.shape)
        FA = np.einsum("ks,bds->bdk", F, A_soft.astype(np.complex64))
        outs.append(FV * FA)
    cat = np.concatenate(outs, axis=1)
    out = np.einsum("bck,ock->bok", cat, ko_lm)
    return out.reshape(B, -1, L, M)


# ----------------------------------------------------------------------------
if __name__ == "__main__":
    # Module configuration (small)
    in_channels, out_channels, L, num_heads = 4, 4, 4, 2
    head_dim = in_channels // num_heads
    B = 2
    M = 2 * L - 1
    K = L * M                                    # 28
    Kp = ((K + 127) // 128) * 128                # lane-pad to 128 multiple

    # Deterministic parameters / inputs
    keys = jax.random.split(jax.random.PRNGKey(0), 6)
    k_q = jax.random.normal(keys[0], (num_heads, head_dim, head_dim, L, M), jnp.float32)
    k_k = jax.random.normal(keys[1], (num_heads, head_dim, head_dim, L, M), jnp.float32)
    k_v = jax.random.normal(keys[2], (num_heads, head_dim, head_dim, L, M), jnp.float32)
    k_o = jax.random.normal(keys[3], (out_channels, in_channels, L, M), jnp.float32)
    f_re = jax.random.normal(keys[4], (B, in_channels, L, M), jnp.float32)
    f_im = jax.random.normal(keys[5], (B, in_channels, L, M), jnp.float32)

    Y, F = build_sht_matrices(L)                 # synthesis / analysis (K,K) complex64

    # Transform weights to spectral domain (parameter setup, plain numpy glue)
    def to_spectral(w):
        flat = np.asarray(w).reshape(w.shape[:-2] + (K,)).astype(np.complex64)
        return np.einsum("ks,...s->...k", F, flat)

    kq_lm = to_spectral(k_q)                     # (H, Cd, Cd, K) complex64
    kk_lm = to_spectral(k_k)
    kv_lm = to_spectral(k_v)
    ko_lm = to_spectral(k_o)                     # (O, C, K) complex64

    # Input in spectral domain (complex), reorganized head-major for the kernel
    f_in = (np.asarray(f_re) + 1j * np.asarray(f_im)).astype(np.complex64)
    f_heads = f_in.reshape(B, num_heads, head_dim, K).transpose(1, 0, 2, 3)   # (H,B,Cd,K)
    ko_heads = ko_lm.reshape(out_channels, num_heads, head_dim, K).transpose(1, 0, 2, 3)

    # Pack complex (..., K) -> f32 (2, ..., Kp) (real/imag planes, lane-padded)
    def pack_ri(x_c, Kp):
        pad = [(0, 0)] * (x_c.ndim - 1) + [(0, Kp - x_c.shape[-1])]
        xr = np.pad(np.ascontiguousarray(x_c.real), pad)
        xi = np.pad(np.ascontiguousarray(x_c.imag), pad)
        return jnp.asarray(np.stack([xr, xi], axis=0), jnp.float32)

    f_ri = pack_ri(f_heads, Kp)                  # (2, H, B, Cd, Kp)
    kq_ri = pack_ri(kq_lm, Kp)                   # (2, H, Cd, Cd, Kp)
    kk_ri = pack_ri(kk_lm, Kp)
    kv_ri = pack_ri(kv_lm, Kp)
    ko_ri = pack_ri(ko_heads, Kp)                # (2, H, O, Cd, Kp)

    # Packed, padded SHT matrices: [Re(Y)^T, Im(Y)^T, Re(F)^T, Im(F)^T], bf16.
    sht_np = np.zeros((4, Kp, Kp), np.float32)
    sht_np[0, :K, :K] = Y.real.T                 # inverse (synthesis), Re
    sht_np[1, :K, :K] = Y.imag.T                 # inverse (synthesis), Im
    sht_np[2, :K, :K] = F.real.T                 # forward (analysis), Re
    sht_np[3, :K, :K] = F.imag.T                 # forward (analysis), Im
    sht_mats = jnp.asarray(sht_np, jnp.bfloat16)

    out_ri = spherical_mha_pallas(f_ri, kq_ri, kk_ri, kv_ri, ko_ri,
                                  sht_mats, K)
    jax.block_until_ready(out_ri)

    out_np = np.asarray(out_ri, np.float32)      # (2, B, O, Kp)
    out_kernel = (out_np[0, ..., :K] + 1j * out_np[1, ..., :K]).reshape(
        B, out_channels, L, M)
    out_ref = reference_numpy(f_in, kq_lm, kk_lm, kv_lm, ko_lm, Y, F,
                              num_heads, head_dim, L)

    scale = np.max(np.abs(out_ref)) + 1.0
    max_err = np.max(np.abs(out_kernel - out_ref))
    assert max_err < 5e-2 * scale, f"mismatch: {max_err} vs scale {scale}"

    print("KERNEL_OK")
</pallas_src>

<mosaic_0001>
module attributes {stable_mosaic.version = 11 : i64} {
  func.func @smha_kernel(%arg0: i32, %arg1: i32, %arg2: i32, %arg3: memref<2x1x2x2x128xf32, #tpu.memory_space<vmem>>, %arg4: memref<2x1x2x2x128xf32, #tpu.memory_space<vmem>>, %arg5: memref<2x1x2x2x128xf32, #tpu.memory_space<vmem>>, %arg6: memref<2x1x2x2x128xf32, #tpu.memory_space<vmem>>, %arg7: memref<2x1x4x2x128xf32, #tpu.memory_space<vmem>>, %arg8: memref<4x128x128xbf16, #tpu.memory_space<any>>, %arg9: memref<1x2x2x4x128xf32, #tpu.memory_space<vmem>>, %arg10: memref<4x128x128xbf16, #tpu.memory_space<vmem>>, %arg11: memref<!tpu.dma_semaphore, #tpu.memory_space<semaphore_mem>>) attributes {dimension_semantics = [#tpu.dimension_semantics<parallel>, #tpu.dimension_semantics<parallel>, #tpu.dimension_semantics<arbitrary>], iteration_bounds = array<i64: 2, 1, 1>, scalar_prefetch = 0 : i64, scratch_operands = 2 : i64, tpu.core_type = #tpu.core_type<tc>, window_params = [{transform_indices = @transform_0, window_bounds = array<i64: 2, 1, 2, 2, 128>}, {transform_indices = @transform_1, window_bounds = array<i64: 2, 1, 2, 2, 128>}, {transform_indices = @transform_2, window_bounds = array<i64: 2, 1, 2, 2, 128>}, {transform_indices = @transform_3, window_bounds = array<i64: 2, 1, 2, 2, 128>}, {transform_indices = @transform_4, window_bounds = array<i64: 2, 1, 4, 2, 128>}, {}, {transform_indices = @transform_6, window_bounds = array<i64: 1, 2, 2, 4, 128>}]} {
    %c0_i32 = arith.constant 0 : i32
    %0 = arith.cmpi eq, %arg2, %c0_i32 : i32
    %1 = arith.extui %0 : i1 to i32
    %c0_i32_0 = arith.constant 0 : i32
    %2 = arith.cmpi ne, %1, %c0_i32_0 : i32
    scf.if %2 {
      tpu.enqueue_dma source(%arg8 : memref<4x128x128xbf16, #tpu.memory_space<any>>) target(%arg10 : memref<4x128x128xbf16, #tpu.memory_space<vmem>>) target_semaphore(%arg11 : memref<!tpu.dma_semaphore, #tpu.memory_space<semaphore_mem>>)
      tpu.wait_dma2 semaphore(%arg11 : memref<!tpu.dma_semaphore, #tpu.memory_space<semaphore_mem>>) src(%arg8 : memref<4x128x128xbf16, #tpu.memory_space<any>>) dst(%arg10 : memref<4x128x128xbf16, #tpu.memory_space<vmem>>)
      %cst_95 = arith.constant 0.000000e+00 : f32
      %294 = vector.broadcast %cst_95 : f32 to vector<1x2x2x4x128xf32>
      %c0_96 = arith.constant 0 : index
      %c0_97 = arith.constant 0 : index
      %c0_98 = arith.constant 0 : index
      %c0_99 = arith.constant 0 : index
      %c0_100 = arith.constant 0 : index
      %295 = vector.load %arg9[%c0_96, %c0_97, %c0_98, %c0_99, %c0_100] : memref<1x2x2x4x128xf32, #tpu.memory_space<vmem>>, vector<1x2x2x4x128xf32>
      tpu.vector_store %arg9[%c0_96, %c0_97, %c0_98, %c0_99, %c0_100], %294 {strides = array<i32>} : memref<1x2x2x4x128xf32, #tpu.memory_space<vmem>>, vector<1x2x2x4x128xf32>,
    } else {
    }
    %c0 = arith.constant 0 : index
    %c0_1 = arith.constant 0 : index
    %c0_2 = arith.constant 0 : index
    %c0_3 = arith.constant 0 : index
    %c0_4 = arith.constant 0 : index
    %3 = vector.load %arg3[%c0, %c0_1, %c0_2, %c0_3, %c0_4] : memref<2x1x2x2x128xf32, #tpu.memory_space<vmem>>, vector<1x1x2x2x128xf32>
    %4 = vector.shape_cast %3 : vector<1x1x2x2x128xf32> to vector<2x2x128xf32>
    %c1 = arith.constant 1 : index
    %c0_5 = arith.constant 0 : index
    %c0_6 = arith.constant 0 : index
    %c0_7 = arith.constant 0 : index
    %c0_8 = arith.constant 0 : index
    %5 = vector.load %arg3[%c1, %c0_5, %c0_6, %c0_7, %c0_8] : memref<2x1x2x2x128xf32, #tpu.memory_space<vmem>>, vector<1x1x2x2x128xf32>
    %6 = vector.shape_cast %5 : vector<1x1x2x2x128xf32> to vector<2x2x128xf32>
    %c0_9 = arith.constant 0 : index
    %c0_10 = arith.constant 0 : index
    %c0_11 = arith.constant 0 : index
    %c0_12 = arith.constant 0 : index
    %c0_13 = arith.constant 0 : index
    %7 = vector.load %arg4[%c0_9, %c0_10, %c0_11, %c0_12, %c0_13] : memref<2x1x2x2x128xf32, #tpu.memory_space<vmem>>, vector<1x1x2x2x128xf32>
    %8 = vector.shape_cast %7 : vector<1x1x2x2x128xf32> to vector<2x2x128xf32>
    %c1_14 = arith.constant 1 : index
    %c0_15 = arith.constant 0 : index
    %c0_16 = arith.constant 0 : index
    %c0_17 = arith.constant 0 : index
    %c0_18 = arith.constant 0 : index
    %9 = vector.load %arg4[%c1_14, %c0_15, %c0_16, %c0_17, %c0_18] : memref<2x1x2x2x128xf32, #tpu.memory_space<vmem>>, vector<1x1x2x2x128xf32>
    %10 = vector.shape_cast %9 : vector<1x1x2x2x128xf32> to vector<2x2x128xf32>
    %cst = arith.constant 0.000000e+00 : f32
    %11 = vector.broadcast %cst : f32 to vector<2x2x128xf32>
    %cst_19 = arith.constant 0.000000e+00 : f32
    %12 = vector.broadcast %cst_19 : f32 to vector<2x2x128xf32>
    %13 = vector.extract_strided_slice %4 {offsets = [0, 0, 0], sizes = [2, 1, 128], strides = [1, 1, 1]} : vector<2x2x128xf32> to vector<2x1x128xf32>
    %14 = vector.extract_strided_slice %6 {offsets = [0, 0, 0], sizes = [2, 1, 128], strides = [1, 1, 1]} : vector<2x2x128xf32> to vector<2x1x128xf32>
    %15 = vector.extract_strided_slice %8 {offsets = [0, 0, 0], sizes = [1, 2, 128], strides = [1, 1, 1]} : vector<2x2x128xf32> to vector<1x2x128xf32>
    %16 = vector.shape_cast %15 : vector<1x2x128xf32> to vector<2x128xf32>
    %17 = vector.shape_cast %16 : vector<2x128xf32> to vector<1x2x128xf32>
    %18 = vector.extract_strided_slice %10 {offsets = [0, 0, 0], sizes = [1, 2, 128], strides = [1, 1, 1]} : vector<2x2x128xf32> to vector<1x2x128xf32>
    %19 = vector.shape_cast %18 : vector<1x2x128xf32> to vector<2x128xf32>
    %20 = vector.shape_cast %19 : vector<2x128xf32> to vector<1x2x128xf32>
    %21 = vector.broadcast %13 : vector<2x1x128xf32> to vector<2x2x128xf32>
    %22 = vector.broadcast %17 : vector<1x2x128xf32> to vector<2x2x128xf32>
    %23 = arith.mulf %21, %22 : vector<2x2x128xf32>
    %24 = arith.addf %11, %23 : vector<2x2x128xf32>
    %25 = vector.broadcast %14 : vector<2x1x128xf32> to vector<2x2x128xf32>
    %26 = vector.broadcast %20 : vector<1x2x128xf32> to vector<2x2x128xf32>
    %27 = arith.mulf %25, %26 : vector<2x2x128xf32>
    %28 = arith.subf %24, %27 : vector<2x2x128xf32>
    %29 = vector.broadcast %13 : vector<2x1x128xf32> to vector<2x2x128xf32>
    %30 = vector.broadcast %20 : vector<1x2x128xf32> to vector<2x2x128xf32>
    %31 = arith.mulf %29, %30 : vector<2x2x128xf32>
    %32 = arith.addf %12, %31 : vector<2x2x128xf32>
    %33 = vector.broadcast %14 : vector<2x1x128xf32> to vector<2x2x128xf32>
    %34 = vector.broadcast %17 : vector<1x2x128xf32> to vector<2x2x128xf32>
    %35 = arith.mulf %33, %34 : vector<2x2x128xf32>
    %36 = arith.addf %32, %35 : vector<2x2x128xf32>
    %37 = vector.extract_strided_slice %4 {offsets = [0, 1, 0], sizes = [2, 1, 128], strides = [1, 1, 1]} : vector<2x2x128xf32> to vector<2x1x128xf32>
    %38 = vector.extract_strided_slice %6 {offsets = [0, 1, 0], sizes = [2, 1, 128], strides = [1, 1, 1]} : vector<2x2x128xf32> to vector<2x1x128xf32>
    %39 = vector.extract_strided_slice %8 {offsets = [1, 0, 0], sizes = [1, 2, 128], strides = [1, 1, 1]} : vector<2x2x128xf32> to vector<1x2x128xf32>
    %40 = vector.shape_cast %39 : vector<1x2x128xf32> to vector<2x128xf32>
    %41 = vector.shape_cast %40 : vector<2x128xf32> to vector<1x2x128xf32>
    %42 = vector.extract_strided_slice %10 {offsets = [1, 0, 0], sizes = [1, 2, 128], strides = [1, 1, 1]} : vector<2x2x128xf32> to vector<1x2x128xf32>
    %43 = vector.shape_cast %42 : vector<1x2x128xf32> to vector<2x128xf32>
    %44 = vector.shape_cast %43 : vector<2x128xf32> to vector<1x2x128xf32>
    %45 = vector.broadcast %37 : vector<2x1x128xf32> to vector<2x2x128xf32>
    %46 = vector.broadcast %41 : vector<1x2x128xf32> to vector<2x2x128xf32>
    %47 = arith.mulf %45, %46 : vector<2x2x128xf32>
    %48 = arith.addf %28, %47 : vector<2x2x128xf32>
    %49 = vector.broadcast %38 : vector<2x1x128xf32> to vector<2x2x128xf32>
    %50 = vector.broadcast %44 : vector<1x2x128xf32> to vector<2x2x128xf32>
    %51 = arith.mulf %49, %50 : vector<2x2x128xf32>
    %52 = arith.subf %48, %51 : vector<2x2x128xf32>
    %53 = vector.broadcast %37 : vector<2x1x128xf32> to vector<2x2x128xf32>
    %54 = vector.broadcast %44 : vector<1x2x128xf32> to vector<2x2x128xf32>
    %55 = arith.mulf %53, %54 : vector<2x2x128xf32>
    %56 = arith.addf %36, %55 : vector<2x2x128xf32>
    %57 = vector.broadcast %38 : vector<2x1x128xf32> to vector<2x2x128xf32>
    %58 = vector.broadcast %41 : vector<1x2x128xf32> to vector<2x2x128xf32>
    %59 = arith.mulf %57, %58 : vector<2x2x128xf32>
    %60 = arith.addf %56, %59 : vector<2x2x128xf32>
    %c0_20 = arith.constant 0 : index
    %c0_21 = arith.constant 0 : index
    %c0_22 = arith.constant 0 : index
    %c0_23 = arith.constant 0 : index
    %c0_24 = arith.constant 0 : index
    %61 = vector.load %arg5[%c0_20, %c0_21, %c0_22, %c0_23, %c0_24] : memref<2x1x2x2x128xf32, #tpu.memory_space<vmem>>, vector<1x1x2x2x128xf32>
    %62 = vector.shape_cast %61 : vector<1x1x2x2x128xf32> to vector<2x2x128xf32>
    %c1_25 = arith.constant 1 : index
    %c0_26 = arith.constant 0 : index
    %c0_27 = arith.constant 0 : index
    %c0_28 = arith.constant 0 : index
    %c0_29 = arith.constant 0 : index
    %63 = vector.load %arg5[%c1_25, %c0_26, %c0_27, %c0_28, %c0_29] : memref<2x1x2x2x128xf32, #tpu.memory_space<vmem>>, vector<1x1x2x2x128xf32>
    %64 = vector.shape_cast %63 : vector<1x1x2x2x128xf32> to vector<2x2x128xf32>
    %cst_30 = arith.constant 0.000000e+00 : f32
    %65 = vector.broadcast %cst_30 : f32 to vector<2x2x128xf32>
    %cst_31 = arith.constant 0.000000e+00 : f32
    %66 = vector.broadcast %cst_31 : f32 to vector<2x2x128xf32>
    %67 = vector.extract_strided_slice %4 {offsets = [0, 0, 0], sizes = [2, 1, 128], strides = [1, 1, 1]} : vector<2x2x128xf32> to vector<2x1x128xf32>
    %68 = vector.extract_strided_slice %6 {offsets = [0, 0, 0], sizes = [2, 1, 128], strides = [1, 1, 1]} : vector<2x2x128xf32> to vector<2x1x128xf32>
    %69 = vector.extract_strided_slice %62 {offsets = [0, 0, 0], sizes = [1, 2, 128], strides = [1, 1, 1]} : vector<2x2x128xf32> to vector<1x2x128xf32>
    %70 = vector.shape_cast %69 : vector<1x2x128xf32> to vector<2x128xf32>
    %71 = vector.shape_cast %70 : vector<2x128xf32> to vector<1x2x128xf32>
    %72 = vector.extract_strided_slice %64 {offsets = [0, 0, 0], sizes = [1, 2, 128], strides = [1, 1, 1]} : vector<2x2x128xf32> to vector<1x2x128xf32>
    %73 = vector.shape_cast %72 : vector<1x2x128xf32> to vector<2x128xf32>
    %74 = vector.shape_cast %73 : vector<2x128xf32> to vector<1x2x128xf32>
    %75 = vector.broadcast %67 : vector<2x1x128xf32> to vector<2x2x128xf32>
    %76 = vector.broadcast %71 : vector<1x2x128xf32> to vector<2x2x128xf32>
    %77 = arith.mulf %75, %76 : vector<2x2x128xf32>
    %78 = arith.addf %65, %77 : vector<2x2x128xf32>
    %79 = vector.broadcast %68 : vector<2x1x128xf32> to vector<2x2x128xf32>
    %80 = vector.broadcast %74 : vector<1x2x128xf32> to vector<2x2x128xf32>
    %81 = arith.mulf %79, %80 : vector<2x2x128xf32>
    %82 = arith.subf %78, %81 : vector<2x2x128xf32>
    %83 = vector.broadcast %67 : vector<2x1x128xf32> to vector<2x2x128xf32>
    %84 = vector.broadcast %74 : vector<1x2x128xf32> to vector<2x2x128xf32>
    %85 = arith.mulf %83, %84 : vector<2x2x128xf32>
    %86 = arith.addf %66, %85 : vector<2x2x128xf32>
    %87 = vector.broadcast %68 : vector<2x1x128xf32> to vector<2x2x128xf32>
    %88 = vector.broadcast %71 : vector<1x2x128xf32> to vector<2x2x128xf32>
    %89 = arith.mulf %87, %88 : vector<2x2x128xf32>
    %90 = arith.addf %86, %89 : vector<2x2x128xf32>
    %91 = vector.extract_strided_slice %4 {offsets = [0, 1, 0], sizes = [2, 1, 128], strides = [1, 1, 1]} : vector<2x2x128xf32> to vector<2x1x128xf32>
    %92 = vector.extract_strided_slice %6 {offsets = [0, 1, 0], sizes = [2, 1, 128], strides = [1, 1, 1]} : vector<2x2x128xf32> to vector<2x1x128xf32>
    %93 = vector.extract_strided_slice %62 {offsets = [1, 0, 0], sizes = [1, 2, 128], strides = [1, 1, 1]} : vector<2x2x128xf32> to vector<1x2x128xf32>
    %94 = vector.shape_cast %93 : vector<1x2x128xf32> to vector<2x128xf32>
    %95 = vector.shape_cast %94 : vector<2x128xf32> to vector<1x2x128xf32>
    %96 = vector.extract_strided_slice %64 {offsets = [1, 0, 0], sizes = [1, 2, 128], strides = [1, 1, 1]} : vector<2x2x128xf32> to vector<1x2x128xf32>
    %97 = vector.shape_cast %96 : vector<1x2x128xf32> to vector<2x128xf32>
    %98 = vector.shape_cast %97 : vector<2x128xf32> to vector<1x2x128xf32>
    %99 = vector.broadcast %91 : vector<2x1x128xf32> to vector<2x2x128xf32>
    %100 = vector.broadcast %95 : vector<1x2x128xf32> to vector<2x2x128xf32>
    %101 = arith.mulf %99, %100 : vector<2x2x128xf32>
    %102 = arith.addf %82, %101 : vector<2x2x128xf32>
    %103 = vector.broadcast %92 : vector<2x1x128xf32> to vector<2x2x128xf32>
    %104 = vector.broadcast %98 : vector<1x2x128xf32> to vector<2x2x128xf32>
    %105 = arith.mulf %103, %104 : vector<2x2x128xf32>
    %106 = arith.subf %102, %105 : vector<2x2x128xf32>
    %107 = vector.broadcast %91 : vector<2x1x128xf32> to vector<2x2x128xf32>
    %108 = vector.broadcast %98 : vector<1x2x128xf32> to vector<2x2x128xf32>
    %109 = arith.mulf %107, %108 : vector<2x2x128xf32>
    %110 = arith.addf %90, %109 : vector<2x2x128xf32>
    %111 = vector.broadcast %92 : vector<2x1x128xf32> to vector<2x2x128xf32>
    %112 = vector.broadcast %95 : vector<1x2x128xf32> to vector<2x2x128xf32>
    %113 = arith.mulf %111, %112 : vector<2x2x128xf32>
    %114 = arith.addf %110, %113 : vector<2x2x128xf32>
    %c0_32 = arith.constant 0 : index
    %c0_33 = arith.constant 0 : index
    %c0_34 = arith.constant 0 : index
    %c0_35 = arith.constant 0 : index
    %c0_36 = arith.constant 0 : index
    %115 = vector.load %arg6[%c0_32, %c0_33, %c0_34, %c0_35, %c0_36] : memref<2x1x2x2x128xf32, #tpu.memory_space<vmem>>, vector<1x1x2x2x128xf32>
    %116 = vector.shape_cast %115 : vector<1x1x2x2x128xf32> to vector<2x2x128xf32>
    %c1_37 = arith.constant 1 : index
    %c0_38 = arith.constant 0 : index
    %c0_39 = arith.constant 0 : index
    %c0_40 = arith.constant 0 : index
    %c0_41 = arith.constant 0 : index
    %117 = vector.load %arg6[%c1_37, %c0_38, %c0_39, %c0_40, %c0_41] : memref<2x1x2x2x128xf32, #tpu.memory_space<vmem>>, vector<1x1x2x2x128xf32>
    %118 = vector.shape_cast %117 : vector<1x1x2x2x128xf32> to vector<2x2x128xf32>
    %cst_42 = arith.constant 0.000000e+00 : f32
    %119 = vector.broadcast %cst_42 : f32 to vector<2x2x128xf32>
    %cst_43 = arith.constant 0.000000e+00 : f32
    %120 = vector.broadcast %cst_43 : f32 to vector<2x2x128xf32>
    %121 = vector.extract_strided_slice %4 {offsets = [0, 0, 0], sizes = [2, 1, 128], strides = [1, 1, 1]} : vector<2x2x128xf32> to vector<2x1x128xf32>
    %122 = vector.extract_strided_slice %6 {offsets = [0, 0, 0], sizes = [2, 1, 128], strides = [1, 1, 1]} : vector<2x2x128xf32> to vector<2x1x128xf32>
    %123 = vector.extract_strided_slice %116 {offsets = [0, 0, 0], sizes = [1, 2, 128], strides = [1, 1, 1]} : vector<2x2x128xf32> to vector<1x2x128xf32>
    %124 = vector.shape_cast %123 : vector<1x2x128xf32> to vector<2x128xf32>
    %125 = vector.shape_cast %124 : vector<2x128xf32> to vector<1x2x128xf32>
    %126 = vector.extract_strided_slice %118 {offsets = [0, 0, 0], sizes = [1, 2, 128], strides = [1, 1, 1]} : vector<2x2x128xf32> to vector<1x2x128xf32>
    %127 = vector.shape_cast %126 : vector<1x2x128xf32> to vector<2x128xf32>
    %128 = vector.shape_cast %127 : vector<2x128xf32> to vector<1x2x128xf32>
    %129 = vector.broadcast %121 : vector<2x1x128xf32> to vector<2x2x128xf32>
    %130 = vector.broadcast %125 : vector<1x2x128xf32> to vector<2x2x128xf32>
    %131 = arith.mulf %129, %130 : vector<2x2x128xf32>
    %132 = arith.addf %119, %131 : vector<2x2x128xf32>
    %133 = vector.broadcast %122 : vector<2x1x128xf32> to vector<2x2x128xf32>
    %134 = vector.broadcast %128 : vector<1x2x128xf32> to vector<2x2x128xf32>
    %135 = arith.mulf %133, %134 : vector<2x2x128xf32>
    %136 = arith.subf %132, %135 : vector<2x2x128xf32>
    %137 = vector.broadcast %121 : vector<2x1x128xf32> to vector<2x2x128xf32>
    %138 = vector.broadcast %128 : vector<1x2x128xf32> to vector<2x2x128xf32>
    %139 = arith.mulf %137, %138 : vector<2x2x128xf32>
    %140 = arith.addf %120, %139 : vector<2x2x128xf32>
    %141 = vector.broadcast %122 : vector<2x1x128xf32> to vector<2x2x128xf32>
    %142 = vector.broadcast %125 : vector<1x2x128xf32> to vector<2x2x128xf32>
    %143 = arith.mulf %141, %142 : vector<2x2x128xf32>
    %144 = arith.addf %140, %143 : vector<2x2x128xf32>
    %145 = vector.extract_strided_slice %4 {offsets = [0, 1, 0], sizes = [2, 1, 128], strides = [1, 1, 1]} : vector<2x2x128xf32> to vector<2x1x128xf32>
    %146 = vector.extract_strided_slice %6 {offsets = [0, 1, 0], sizes = [2, 1, 128], strides = [1, 1, 1]} : vector<2x2x128xf32> to vector<2x1x128xf32>
    %147 = vector.extract_strided_slice %116 {offsets = [1, 0, 0], sizes = [1, 2, 128], strides = [1, 1, 1]} : vector<2x2x128xf32> to vector<1x2x128xf32>
    %148 = vector.shape_cast %147 : vector<1x2x128xf32> to vector<2x128xf32>
    %149 = vector.shape_cast %148 : vector<2x128xf32> to vector<1x2x128xf32>
    %150 = vector.extract_strided_slice %118 {offsets = [1, 0, 0], sizes = [1, 2, 128], strides = [1, 1, 1]} : vector<2x2x128xf32> to vector<1x2x128xf32>
    %151 = vector.shape_cast %150 : vector<1x2x128xf32> to vector<2x128xf32>
    %152 = vector.shape_cast %151 : vector<2x128xf32> to vector<1x2x128xf32>
    %153 = vector.broadcast %145 : vector<2x1x128xf32> to vector<2x2x128xf32>
    %154 = vector.broadcast %149 : vector<1x2x128xf32> to vector<2x2x128xf32>
    %155 = arith.mulf %153, %154 : vector<2x2x128xf32>
    %156 = arith.addf %136, %155 : vector<2x2x128xf32>
    %157 = vector.broadcast %146 : vector<2x1x128xf32> to vector<2x2x128xf32>
    %158 = vector.broadcast %152 : vector<1x2x128xf32> to vector<2x2x128xf32>
    %159 = arith.mulf %157, %158 : vector<2x2x128xf32>
    %160 = arith.subf %156, %159 : vector<2x2x128xf32>
    %161 = vector.broadcast %145 : vector<2x1x128xf32> to vector<2x2x128xf32>
    %162 = vector.broadcast %152 : vector<1x2x128xf32> to vector<2x2x128xf32>
    %163 = arith.mulf %161, %162 : vector<2x2x128xf32>
    %164 = arith.addf %144, %163 : vector<2x2x128xf32>
    %165 = vector.broadcast %146 : vector<2x1x128xf32> to vector<2x2x128xf32>
    %166 = vector.broadcast %149 : vector<1x2x128xf32> to vector<2x2x128xf32>
    %167 = arith.mulf %165, %166 : vector<2x2x128xf32>
    %168 = arith.addf %164, %167 : vector<2x2x128xf32>
    %169 = arith.mulf %52, %106 : vector<2x2x128xf32>
    %170 = arith.mulf %60, %114 : vector<2x2x128xf32>
    %171 = arith.addf %169, %170 : vector<2x2x128xf32>
    %172 = vector.shape_cast %171 : vector<2x2x128xf32> to vector<4x128xf32>
    %173 = arith.mulf %60, %106 : vector<2x2x128xf32>
    %174 = arith.mulf %52, %114 : vector<2x2x128xf32>
    %175 = arith.subf %173, %174 : vector<2x2x128xf32>
    %176 = vector.shape_cast %175 : vector<2x2x128xf32> to vector<4x128xf32>
    %177 = arith.truncf %172 : vector<4x128xf32> to vector<4x128xbf16>
    %178 = arith.extf %177 : vector<4x128xbf16> to vector<4x128xf32>
    %179 = arith.subf %172, %178 : vector<4x128xf32>
    %180 = arith.truncf %179 : vector<4x128xf32> to vector<4x128xbf16>
    %181 = arith.truncf %176 : vector<4x128xf32> to vector<4x128xbf16>
    %182 = arith.extf %181 : vector<4x128xbf16> to vector<4x128xf32>
    %183 = arith.subf %176, %182 : vector<4x128xf32>
    %184 = arith.truncf %183 : vector<4x128xf32> to vector<4x128xbf16>
    %c0_44 = arith.constant 0 : index
    %c0_45 = arith.constant 0 : index
    %c0_46 = arith.constant 0 : index
    %185 = vector.load %arg10[%c0_44, %c0_45, %c0_46] : memref<4x128x128xbf16, #tpu.memory_space<vmem>>, vector<1x128x128xbf16>
    %186 = vector.shape_cast %185 : vector<1x128x128xbf16> to vector<128x128xbf16>
    %c1_47 = arith.constant 1 : index
    %c0_48 = arith.constant 0 : index
    %c0_49 = arith.constant 0 : index
    %187 = vector.load %arg10[%c1_47, %c0_48, %c0_49] : memref<4x128x128xbf16, #tpu.memory_space<vmem>>, vector<1x128x128xbf16>
    %188 = vector.shape_cast %187 : vector<1x128x128xbf16> to vector<128x128xbf16>
    %cst_50 = arith.constant dense<0.000000e+00> : vector<4x128xf32>
    %189 = tpu.matmul %177, %186, %cst_50 {dimension_numbers = #tpu.dot_dimension_numbers<[1], [0], [0], [1], [0, 0, 1, 1], [], []>} : vector<4x128xbf16>, vector<128x128xbf16>, vector<4x128xf32> -> vector<4x128xf32>
    %cst_51 = arith.constant dense<0.000000e+00> : vector<4x128xf32>
    %190 = tpu.matmul %180, %186, %cst_51 {dimension_numbers = #tpu.dot_dimension_numbers<[1], [0], [0], [1], [0, 0, 1, 1], [], []>} : vector<4x128xbf16>, vector<128x128xbf16>, vector<4x128xf32> -> vector<4x128xf32>
    %191 = arith.addf %189, %190 : vector<4x128xf32>
    %cst_52 = arith.constant dense<0.000000e+00> : vector<4x128xf32>
    %192 = tpu.matmul %181, %188, %cst_52 {dimension_numbers = #tpu.dot_dimension_numbers<[1], [0], [0], [1], [0, 0, 1, 1], [], []>} : vector<4x128xbf16>, vector<128x128xbf16>, vector<4x128xf32> -> vector<4x128xf32>
    %193 = arith.subf %191, %192 : vector<4x128xf32>
    %cst_53 = arith.constant dense<0.000000e+00> : vector<4x128xf32>
    %194 = tpu.matmul %184, %188, %cst_53 {dimension_numbers = #tpu.dot_dimension_numbers<[1], [0], [0], [1], [0, 0, 1, 1], [], []>} : vector<4x128xbf16>, vector<128x128xbf16>, vector<4x128xf32> -> vector<4x128xf32>
    %195 = arith.subf %193, %194 : vector<4x128xf32>
    %196 = tpu.iota {dimensions = array<i32: 1>} : vector<4x128xi32>
    %c28_i32 = arith.constant 28 : i32
    %197 = vector.broadcast %c28_i32 : i32 to vector<4x128xi32>
    %198 = arith.cmpi slt, %196, %197 : vector<4x128xi32>
    %cst_54 = arith.constant -1.000000e+30 : f32
    %199 = vector.broadcast %cst_54 : f32 to vector<4x128xf32>
    %200 = arith.select %198, %195, %199 : vector<4x128xi1>, vector<4x128xf32>
    %cst_55 = arith.constant dense<0xFF800000> : vector<4xf32>
    %201 = vector.multi_reduction <maximumf>, %200, %cst_55 [1] : vector<4x128xf32> to vector<4xf32>
    %202 = vector.shape_cast %201 : vector<4xf32> to vector<4x1xf32>
    %203 = vector.broadcast %202 : vector<4x1xf32> to vector<4x128xf32>
    %204 = arith.subf %200, %203 : vector<4x128xf32>
    %205 = math.exp %204 : vector<4x128xf32>
    %cst_56 = arith.constant dense<0.000000e+00> : vector<4xf32>
    %206 = vector.multi_reduction <add>, %205, %cst_56 [1] : vector<4x128xf32> to vector<4xf32>
    %207 = vector.shape_cast %206 : vector<4xf32> to vector<4x1xf32>
    %208 = tpu.reciprocal %207 {approx = true} : vector<4x1xf32> -> vector<4x1xf32>
    %209 = vector.broadcast %208 : vector<4x1xf32> to vector<4x128xf32>
    %210 = arith.mulf %205, %209 : vector<4x128xf32>
    %211 = arith.truncf %210 : vector<4x128xf32> to vector<4x128xbf16>
    %c2 = arith.constant 2 : index
    %c0_57 = arith.constant 0 : index
    %c0_58 = arith.constant 0 : index
    %212 = vector.load %arg10[%c2, %c0_57, %c0_58] : memref<4x128x128xbf16, #tpu.memory_space<vmem>>, vector<1x128x128xbf16>
    %213 = vector.shape_cast %212 : vector<1x128x128xbf16> to vector<128x128xbf16>
    %c3 = arith.constant 3 : index
    %c0_59 = arith.constant 0 : index
    %c0_60 = arith.constant 0 : index
    %214 = vector.load %arg10[%c3, %c0_59, %c0_60] : memref<4x128x128xbf16, #tpu.memory_space<vmem>>, vector<1x128x128xbf16>
    %215 = vector.shape_cast %214 : vector<1x128x128xbf16> to vector<128x128xbf16>
    %cst_61 = arith.constant dense<0.000000e+00> : vector<4x128xf32>
    %216 = tpu.matmul %211, %213, %cst_61 {dimension_numbers = #tpu.dot_dimension_numbers<[1], [0], [0], [1], [0, 0, 1, 1], [], []>} : vector<4x128xbf16>, vector<128x128xbf16>, vector<4x128xf32> -> vector<4x128xf32>
    %cst_62 = arith.constant dense<0.000000e+00> : vector<4x128xf32>
    %217 = tpu.matmul %211, %215, %cst_62 {dimension_numbers = #tpu.dot_dimension_numbers<[1], [0], [0], [1], [0, 0, 1, 1], [], []>} : vector<4x128xbf16>, vector<128x128xbf16>, vector<4x128xf32> -> vector<4x128xf32>
    %218 = vector.shape_cast %160 : vector<2x2x128xf32> to vector<4x128xf32>
    %219 = vector.shape_cast %168 : vector<2x2x128xf32> to vector<4x128xf32>
    %220 = arith.mulf %218, %216 : vector<4x128xf32>
    %221 = arith.mulf %219, %217 : vector<4x128xf32>
    %222 = arith.subf %220, %221 : vector<4x128xf32>
    %223 = vector.shape_cast %222 : vector<4x128xf32> to vector<2x2x128xf32>
    %224 = arith.mulf %218, %217 : vector<4x128xf32>
    %225 = arith.mulf %219, %216 : vector<4x128xf32>
    %226 = arith.addf %224, %225 : vector<4x128xf32>
    %227 = vector.shape_cast %226 : vector<4x128xf32> to vector<2x2x128xf32>
    %c0_63 = arith.constant 0 : index
    %c0_64 = arith.constant 0 : index
    %c0_65 = arith.constant 0 : index
    %c0_66 = arith.constant 0 : index
    %c0_67 = arith.constant 0 : index
    %228 = vector.load %arg7[%c0_63, %c0_64, %c0_65, %c0_66, %c0_67] : memref<2x1x4x2x128xf32, #tpu.memory_space<vmem>>, vector<1x1x4x2x128xf32>
    %229 = vector.shape_cast %228 : vector<1x1x4x2x128xf32> to vector<4x2x128xf32>
    %c1_68 = arith.constant 1 : index
    %c0_69 = arith.constant 0 : index
    %c0_70 = arith.constant 0 : index
    %c0_71 = arith.constant 0 : index
    %c0_72 = arith.constant 0 : index
    %230 = vector.load %arg7[%c1_68, %c0_69, %c0_70, %c0_71, %c0_72] : memref<2x1x4x2x128xf32, #tpu.memory_space<vmem>>, vector<1x1x4x2x128xf32>
    %231 = vector.shape_cast %230 : vector<1x1x4x2x128xf32> to vector<4x2x128xf32>
    %cst_73 = arith.constant 0.000000e+00 : f32
    %232 = vector.broadcast %cst_73 : f32 to vector<2x4x128xf32>
    %cst_74 = arith.constant 0.000000e+00 : f32
    %233 = vector.broadcast %cst_74 : f32 to vector<2x4x128xf32>
    %234 = vector.extract_strided_slice %223 {offsets = [0, 0, 0], sizes = [2, 1, 128], strides = [1, 1, 1]} : vector<2x2x128xf32> to vector<2x1x128xf32>
    %235 = vector.extract_strided_slice %227 {offsets = [0, 0, 0], sizes = [2, 1, 128], strides = [1, 1, 1]} : vector<2x2x128xf32> to vector<2x1x128xf32>
    %236 = vector.extract_strided_slice %229 {offsets = [0, 0, 0], sizes = [4, 1, 128], strides = [1, 1, 1]} : vector<4x2x128xf32> to vector<4x1x128xf32>
    %237 = vector.shape_cast %236 : vector<4x1x128xf32> to vector<4x128xf32>
    %238 = vector.shape_cast %237 : vector<4x128xf32> to vector<1x4x128xf32>
    %239 = vector.extract_strided_slice %231 {offsets = [0, 0, 0], sizes = [4, 1, 128], strides = [1, 1, 1]} : vector<4x2x128xf32> to vector<4x1x128xf32>
    %240 = vector.shape_cast %239 : vector<4x1x128xf32> to vector<4x128xf32>
    %241 = vector.shape_cast %240 : vector<4x128xf32> to vector<1x4x128xf32>
    %242 = vector.broadcast %234 : vector<2x1x128xf32> to vector<2x4x128xf32>
    %243 = vector.broadcast %238 : vector<1x4x128xf32> to vector<2x4x128xf32>
    %244 = arith.mulf %242, %243 : vector<2x4x128xf32>
    %245 = arith.addf %232, %244 : vector<2x4x128xf32>
    %246 = vector.broadcast %235 : vector<2x1x128xf32> to vector<2x4x128xf32>
    %247 = vector.broadcast %241 : vector<1x4x128xf32> to vector<2x4x128xf32>
    %248 = arith.mulf %246, %247 : vector<2x4x128xf32>
    %249 = arith.subf %245, %248 : vector<2x4x128xf32>
    %250 = vector.broadcast %234 : vector<2x1x128xf32> to vector<2x4x128xf32>
    %251 = vector.broadcast %241 : vector<1x4x128xf32> to vector<2x4x128xf32>
    %252 = arith.mulf %250, %251 : vector<2x4x128xf32>
    %253 = arith.addf %233, %252 : vector<2x4x128xf32>
    %254 = vector.broadcast %235 : vector<2x1x128xf32> to vector<2x4x128xf32>
    %255 = vector.broadcast %238 : vector<1x4x128xf32> to vector<2x4x128xf32>
    %256 = arith.mulf %254, %255 : vector<2x4x128xf32>
    %257 = arith.addf %253, %256 : vector<2x4x128xf32>
    %258 = vector.extract_strided_slice %223 {offsets = [0, 1, 0], sizes = [2, 1, 128], strides = [1, 1, 1]} : vector<2x2x128xf32> to vector<2x1x128xf32>
    %259 = vector.extract_strided_slice %227 {offsets = [0, 1, 0], sizes = [2, 1, 128], strides = [1, 1, 1]} : vector<2x2x128xf32> to vector<2x1x128xf32>
    %260 = vector.extract_strided_slice %229 {offsets = [0, 1, 0], sizes = [4, 1, 128], strides = [1, 1, 1]} : vector<4x2x128xf32> to vector<4x1x128xf32>
    %261 = vector.shape_cast %260 : vector<4x1x128xf32> to vector<4x128xf32>
    %262 = vector.shape_cast %261 : vector<4x128xf32> to vector<1x4x128xf32>
    %263 = vector.extract_strided_slice %231 {offsets = [0, 1, 0], sizes = [4, 1, 128], strides = [1, 1, 1]} : vector<4x2x128xf32> to vector<4x1x128xf32>
    %264 = vector.shape_cast %263 : vector<4x1x128xf32> to vector<4x128xf32>
    %265 = vector.shape_cast %264 : vector<4x128xf32> to vector<1x4x128xf32>
    %266 = vector.broadcast %258 : vector<2x1x128xf32> to vector<2x4x128xf32>
    %267 = vector.broadcast %262 : vector<1x4x128xf32> to vector<2x4x128xf32>
    %268 = arith.mulf %266, %267 : vector<2x4x128xf32>
    %269 = arith.addf %249, %268 : vector<2x4x128xf32>
    %270 = vector.broadcast %259 : vector<2x1x128xf32> to vector<2x4x128xf32>
    %271 = vector.broadcast %265 : vector<1x4x128xf32> to vector<2x4x128xf32>
    %272 = arith.mulf %270, %271 : vector<2x4x128xf32>
    %273 = arith.subf %269, %272 : vector<2x4x128xf32>
    %274 = vector.broadcast %258 : vector<2x1x128xf32> to vector<2x4x128xf32>
    %275 = vector.broadcast %265 : vector<1x4x128xf32> to vector<2x4x128xf32>
    %276 = arith.mulf %274, %275 : vector<2x4x128xf32>
    %277 = arith.addf %257, %276 : vector<2x4x128xf32>
    %278 = vector.broadcast %259 : vector<2x1x128xf32> to vector<2x4x128xf32>
    %279 = vector.broadcast %262 : vector<1x4x128xf32> to vector<2x4x128xf32>
    %280 = arith.mulf %278, %279 : vector<2x4x128xf32>
    %281 = arith.addf %277, %280 : vector<2x4x128xf32>
    %c0_75 = arith.constant 0 : index
    %c0_76 = arith.constant 0 : index
    %c0_77 = arith.constant 0 : index
    %c0_78 = arith.constant 0 : index
    %c0_79 = arith.constant 0 : index
    %282 = vector.load %arg9[%c0_75, %c0_76, %c0_77, %c0_78, %c0_79] : memref<1x2x2x4x128xf32, #tpu.memory_space<vmem>>, vector<1x1x2x4x128xf32>
    %283 = vector.shape_cast %282 : vector<1x1x2x4x128xf32> to vector<2x4x128xf32>
    %284 = arith.addf %283, %273 : vector<2x4x128xf32>
    %c0_80 = arith.constant 0 : index
    %c0_81 = arith.constant 0 : index
    %c0_82 = arith.constant 0 : index
    %c0_83 = arith.constant 0 : index
    %c0_84 = arith.constant 0 : index
    %285 = vector.load %arg9[%c0_80, %c0_81, %c0_82, %c0_83, %c0_84] : memref<1x2x2x4x128xf32, #tpu.memory_space<vmem>>, vector<1x1x2x4x128xf32>
    %286 = vector.shape_cast %285 : vector<1x1x2x4x128xf32> to vector<2x4x128xf32>
    %287 = vector.shape_cast %284 : vector<2x4x128xf32> to vector<1x1x2x4x128xf32>
    tpu.vector_store %arg9[%c0_80, %c0_81, %c0_82, %c0_83, %c0_84], %287 {strides = array<i32>} : memref<1x2x2x4x128xf32, #tpu.memory_space<vmem>>, vector<1x1x2x4x128xf32>,
    %c0_85 = arith.constant 0 : index
    %c1_86 = arith.constant 1 : index
    %c0_87 = arith.constant 0 : index
    %c0_88 = arith.constant 0 : index
    %c0_89 = arith.constant 0 : index
    %288 = vector.load %arg9[%c0_85, %c1_86, %c0_87, %c0_88, %c0_89] : memref<1x2x2x4x128xf32, #tpu.memory_space<vmem>>, vector<1x1x2x4x128xf32>
    %289 = vector.shape_cast %288 : vector<1x1x2x4x128xf32> to vector<2x4x128xf32>
    %290 = arith.addf %289, %281 : vector<2x4x128xf32>
    %c0_90 = arith.constant 0 : index
    %c1_91 = arith.constant 1 : index
    %c0_92 = arith.constant 0 : index
    %c0_93 = arith.constant 0 : index
    %c0_94 = arith.constant 0 : index
    %291 = vector.load %arg9[%c0_90, %c1_91, %c0_92, %c0_93, %c0_94] : memref<1x2x2x4x128xf32, #tpu.memory_space<vmem>>, vector<1x1x2x4x128xf32>
    %292 = vector.shape_cast %291 : vector<1x1x2x4x128xf32> to vector<2x4x128xf32>
    %293 = vector.shape_cast %290 : vector<2x4x128xf32> to vector<1x1x2x4x128xf32>
    tpu.vector_store %arg9[%c0_90, %c1_91, %c0_92, %c0_93, %c0_94], %293 {strides = array<i32>} : memref<1x2x2x4x128xf32, #tpu.memory_space<vmem>>, vector<1x1x2x4x128xf32>,
    return
  }
  func.func @transform_0(%arg0: i32, %arg1: i32, %arg2: i32) -> (i32, i32, i32, i32, i32) {
    %c1_i32 = arith.constant 1 : i32
    %0 = arith.muli %arg0, %c1_i32 : i32
    %1 = arith.addi %0, %arg2 : i32
    %c0_i32 = arith.constant 0 : i32
    %c0_i32_0 = arith.constant 0 : i32
    %c0_i32_1 = arith.constant 0 : i32
    %c0_i32_2 = arith.constant 0 : i32
    return %c0_i32, %1, %arg1, %c0_i32_0, %c0_i32_1 : i32, i32, i32, i32, i32
  }
  func.func @transform_1(%arg0: i32, %arg1: i32, %arg2: i32) -> (i32, i32, i32, i32, i32) {
    %c1_i32 = arith.constant 1 : i32
    %0 = arith.muli %arg0, %c1_i32 : i32
    %1 = arith.addi %0, %arg2 : i32
    %c0_i32 = arith.constant 0 : i32
    %c0_i32_0 = arith.constant 0 : i32
    %c0_i32_1 = arith.constant 0 : i32
    %c0_i32_2 = arith.constant 0 : i32
    %c0_i32_3 = arith.constant 0 : i32
    return %c0_i32, %1, %c0_i32_0, %c0_i32_1, %c0_i32_2 : i32, i32, i32, i32, i32
  }
  func.func @transform_2(%arg0: i32, %arg1: i32, %arg2: i32) -> (i32, i32, i32, i32, i32) {
    %c1_i32 = arith.constant 1 : i32
    %0 = arith.muli %arg0, %c1_i32 : i32
    %1 = arith.addi %0, %arg2 : i32
    %c0_i32 = arith.constant 0 : i32
    %c0_i32_0 = arith.constant 0 : i32
    %c0_i32_1 = arith.constant 0 : i32
    %c0_i32_2 = arith.constant 0 : i32
    %c0_i32_3 = arith.constant 0 : i32
    return %c0_i32, %1, %c0_i32_0, %c0_i32_1, %c0_i32_2 : i32, i32, i32, i32, i32
  }
  func.func @transform_3(%arg0: i32, %arg1: i32, %arg2: i32) -> (i32, i32, i32, i32, i32) {
    %c1_i32 = arith.constant 1 : i32
    %0 = arith.muli %arg0, %c1_i32 : i32
    %1 = arith.addi %0, %arg2 : i32
    %c0_i32 = arith.constant 0 : i32
    %c0_i32_0 = arith.constant 0 : i32
    %c0_i32_1 = arith.constant 0 : i32
    %c0_i32_2 = arith.constant 0 : i32
    %c0_i32_3 = arith.constant 0 : i32
    return %c0_i32, %1, %c0_i32_0, %c0_i32_1, %c0_i32_2 : i32, i32, i32, i32, i32
  }
  func.func @transform_4(%arg0: i32, %arg1: i32, %arg2: i32) -> (i32, i32, i32, i32, i32) {
    %c1_i32 = arith.constant 1 : i32
    %0 = arith.muli %arg0, %c1_i32 : i32
    %1 = arith.addi %0, %arg2 : i32
    %c0_i32 = arith.constant 0 : i32
    %c0_i32_0 = arith.constant 0 : i32
    %c0_i32_1 = arith.constant 0 : i32
    %c0_i32_2 = arith.constant 0 : i32
    %c0_i32_3 = arith.constant 0 : i32
    return %c0_i32, %1, %c0_i32_0, %c0_i32_1, %c0_i32_2 : i32, i32, i32, i32, i32
  }
  func.func @transform_6(%arg0: i32, %arg1: i32, %arg2: i32) -> (i32, i32, i32, i32, i32) {
    %c0_i32 = arith.constant 0 : i32
    %c0_i32_0 = arith.constant 0 : i32
    %c0_i32_1 = arith.constant 0 : i32
    %c0_i32_2 = arith.constant 0 : i32
    return %arg0, %c0_i32, %arg1, %c0_i32_0, %c0_i32_1 : i32, i32, i32, i32, i32
  }
}

</mosaic_0001>

<llo_original>
// kernel: tpu_custom_call.1
$region0: #{tpu_custom_call.1}
  #allocation0 [shape = 'u32[]', space=smem, size = 0x4, offset = 0x4, fixed_abs, tag = 'smem constant byte address 0x4 - core index']
  #allocation1 [shape = 'u32[144,128]{1,0:T(1,128)}', space=vmem, size = 0x12000, scoped, tag = 'internal scratch']
  #allocation2 [shape = 'bf16[4,128,128]{2,1,0:T(16,128)(2,1)}', space=vmem, size = 0x20000, scoped, tag = 'scratch operand']
  #allocation3 [shape = 's32[1]{0}', space=sflag, size = 0x4, scoped, tag = 'scratch operand']
  #allocation14 [shape = 's32[]', space=sflag, size = 0x4, offset = 0, fixed_abs, tag = 'sflag constant byte address 0x0 - dummy sync flag']
  #allocation16 [shape = 's32[]', space=sflag, size = 0x4, offset = 0, fixed_abs, tag = 'sflag constant byte address 0x0 - dummy sync flag']
  #allocation18 [shape = 's32[]', space=sflag, size = 0x4, offset = 0, fixed_abs, tag = 'sflag constant byte address 0x0 - dummy sync flag']
  #allocation20 [shape = 's32[]', space=sflag, size = 0x4, offset = 0, fixed_abs, tag = 'sflag constant byte address 0x0 - dummy sync flag']
  #allocation22 [shape = 's32[]', space=sflag, size = 0x4, offset = 0, fixed_abs, tag = 'sflag constant byte address 0x0 - dummy sync flag']
  #allocation24 [shape = 's32[]', space=sflag, size = 0x4, offset = 0, fixed_abs, tag = 'sflag constant byte address 0x0 - dummy sync flag']
  #allocation25 [shape = 's32[]', space=sflag, size = 0x4, offset = 0, fixed_abs, tag = 'sflag constant byte address 0x0 - dummy sync flag']
  #allocation26 [shape = 'u32[]', space=smem, size = 0x4, offset = 0x44, fixed_abs, tag = 'smem constant byte address 0x44 - assertion arg 0']
  #allocation27 [shape = 'u32[]', space=smem, size = 0x4, offset = 0x48, fixed_abs, tag = 'smem constant byte address 0x48 - assertion arg 1']
  %s0 = inlined_call_operand.hbm [shape: f32[2,2,2,2,128], index: 0, kind: input, shape index: {}]
  %s1 = inlined_call_operand.hbm [shape: f32[2,2,2,2,128], index: 1, kind: input, shape index: {}]
  %s2 = inlined_call_operand.hbm [shape: f32[2,2,2,2,128], index: 2, kind: input, shape index: {}]
  %s3 = inlined_call_operand.hbm [shape: f32[2,2,2,2,128], index: 3, kind: input, shape index: {}]
  %s4 = inlined_call_operand.hbm [shape: f32[2,2,4,2,128], index: 4, kind: input, shape index: {}]
  %s5 = inlined_call_operand.hbm [shape: bf16[4,128,128], index: 5, kind: input, shape index: {}]
  %s6 = inlined_call_operand.hbm [shape: f32[2,2,2,4,128], index: 6, kind: output, shape index: {}]
  %s7 = sld [smem:[#allocation0]]
  $region81: #{tpu_custom_call.1} parent=0
    _
  %s9 = ssub.s32 1, %s7
  %s10 = scalar_select 0, %s9, %s7
  $region1: #{tpu_custom_call.1} parent=0
    #allocation4 [shape = 'u8[8192]{0}', space=vmem, size = 0x2000, scoped, tag = 'input window, operand 0']
    #allocation5 [shape = 's32[2]{0}', space=sflag, size = 0x8, scoped, tag = 'scoped memory for tpu_custom_call.1']
    #allocation6 [shape = 's32[2]{0}', space=sflag, size = 0x8, scoped, tag = 'scoped memory for tpu_custom_call.1']
    #allocation7 [shape = 'u8[8192]{0}', space=vmem, size = 0x2000, scoped, tag = 'input window, operand 1']
    #allocation8 [shape = 's32[2]{0}', space=sflag, size = 0x8, scoped, tag = 'scoped memory for tpu_custom_call.1']
    #allocation9 [shape = 'u8[8192]{0}', space=vmem, size = 0x2000, scoped, tag = 'input window, operand 2']
    #allocation10 [shape = 'u8[8192]{0}', space=vmem, size = 0x2000, scoped, tag = 'input window, operand 3']
    #allocation11 [shape = 's32[2]{0}', space=sflag, size = 0x8, scoped, tag = 'scoped memory for tpu_custom_call.1']
    #allocation12 [shape = 'u8[16384]{0}', space=vmem, size = 0x4000, scoped, tag = 'input window, operand 4']
    #allocation13 [shape = 'u8[16384]{0}', space=vmem, size = 0x4000, scoped, tag = 'output window, operand 0']
    %11 = vsyncpa [#allocation5], 0
    %s12 = scalar_lea.sflag [#allocation5], 1
    %13 = vsyncpa %s12, 0
    %14 = vsyncpa [#allocation8], 0
    %s15 = scalar_lea.sflag [#allocation8], 1
    %16 = vsyncpa %s15, 0
    %17 = vsyncpa [#allocation11], 0
    %s18 = scalar_lea.sflag [#allocation11], 1
    %19 = vsyncpa %s18, 0
    %20 = vsyncpa [#allocation6], 0
    %s21 = scalar_lea.sflag [#allocation6], 1
    %22 = vsyncpa %s21, 0
    loop: start=0, step=1, limit=4
    $region2: #{tpu_custom_call.1} parent=1 // loop_pre_header
      _
    $region3: #{tpu_custom_call.1} parent=1 // loop_header
      %s24 = sphi 0, %s28
      %p25 = scmp.ge.s32.totalorder %s24, 4
      %s31 = sphi 0, %s50
      %s32 = sphi 0, %s46
      %s33 = sphi 0, %s42
      %s34 = sphi 0, %s31
      %s35 = sphi 0, %s32
      %s36 = sphi 0, %s33
      %s37 = sphi 0, %s34
      %s38 = sphi 0, %s35
      %s39 = sphi 0, %s36
      %s57 = sphi 0, %s59
      %s60 = sphi 0, %s57
      %s61 = sphi 0, %s60
      %s77 = sphi 0, %s61
      %s85 = sphi 0, %s87
      %s88 = sphi 0, %s85
      %s89 = sphi 0, %s88
      %s105 = sphi 0, %s89
      %s113 = sphi 0, %s115
      %s116 = sphi 0, %s113
      %s117 = sphi 0, %s116
      %s133 = sphi 0, %s117
      %s141 = sphi 0, %s143
      %s144 = sphi 0, %s141
      %s145 = sphi 0, %s144
      %s161 = sphi 0, %s145
      %s169 = sphi 0, %s171
      %s172 = sphi 0, %s169
      %s173 = sphi 0, %s172
      %s189 = sphi 0, %s173
      %s197 = sphi 0, %s199
      %s200 = sphi 0, %s197
      %s201 = sphi 0, %s200
      %s217 = sphi 0, %s201
    $region4: #{tpu_custom_call.1} parent=1 // loop_header_branch
      %27 = sbr.rel (%p25) target = $region8
    $region5: #{tpu_custom_call.1} parent=1 // loop_body
      %s29 = ssub.s32 %s24, 1
      %s30 = ssub.s32 %s24, 2
      %s40 = sadd.s32 1, %s33
      %p41 = scmp.ge.s32.totalorder %s40, 1
      %s42 = scalar_select %p41, 0, %s40
      %s43 = sadd.s32 1, %s32
      %s44 = scalar_select %p41, %s43, %s32
      %p45 = scmp.ge.s32.totalorder %s44, 1
      %s46 = scalar_select %p45, 0, %s44
      %s47 = sadd.s32 1, %s31
      %s48 = scalar_select %p45, %s47, %s31
      %p49 = scmp.ge.s32.totalorder %s48, 2
      %s50 = scalar_select %p49, 0, %s48
      %s51 = sadd.s32 %s31, %s33
      %s52 = sadd.s32 %s50, %s42
      %s53 = ssub.s32 %s51, %s52
      %s54 = ssub.s32 %s32, %s46
      %s55 = sor.u32 %s53, %s54
      %p56 = scmp.eq.s32.totalorder %s55, 0
      %s58 = sadd.s32 %s57, 1
      %s59 = scalar_select %p56, %s57, %s58
      %p62 = pneg %p56
      %p63 = scmp.eq.s32.totalorder %s24, 1
      %p64 = por %p62, %p63
      %p65 = scmp.ne.s32.totalorder %s57, %s60
      %p66 = scmp.eq.s32.totalorder %s24, 0
      %p67 = por %p65, %p66
      %p68 = scmp.ne.s32.totalorder %s57, %s60
      %p69 = scmp.eq.s32.totalorder %s29, 1
      %p70 = por %p68, %p69
      %p71 = scmp.ne.s32.totalorder %s60, %s61
      %p72 = scmp.eq.s32.totalorder %s29, 0
      %p73 = por %p71, %p72
      %p74 = scmp.ne.s32.totalorder %s60, %s61
      %p75 = scmp.eq.s32.totalorder %s30, 1
      %p76 = por %p74, %p75
      %p78 = scmp.ne.s32.totalorder %s61, %s77
      %p79 = scmp.eq.s32.totalorder %s30, 0
      %p80 = por %p78, %p79
      %s81 = sadd.s32 %s31, %s33
      %s82 = sadd.s32 %s50, %s42
      %s83 = ssub.s32 %s81, %s82
      %p84 = scmp.eq.s32.totalorder %s83, 0
      %s86 = sadd.s32 %s85, 1
      %s87 = scalar_select %p84, %s85, %s86
      %p90 = pneg %p84
      %p91 = scmp.eq.s32.totalorder %s24, 1
      %p92 = por %p90, %p91
      %p93 = scmp.ne.s32.totalorder %s85, %s88
      %p94 = scmp.eq.s32.totalorder %s24, 0
      %p95 = por %p93, %p94
      %p96 = scmp.ne.s32.totalorder %s85, %s88
      %p97 = scmp.eq.s32.totalorder %s29, 1
      %p98 = por %p96, %p97
      %p99 = scmp.ne.s32.totalorder %s88, %s89
      %p100 = scmp.eq.s32.totalorder %s29, 0
      %p101 = por %p99, %p100
      %p102 = scmp.ne.s32.totalorder %s88, %s89
      %p103 = scmp.eq.s32.totalorder %s30, 1
      %p104 = por %p102, %p103
      %p106 = scmp.ne.s32.totalorder %s89, %s105
      %p107 = scmp.eq.s32.totalorder %s30, 0
      %p108 = por %p106, %p107
      %s109 = sadd.s32 %s31, %s33
      %s110 = sadd.s32 %s50, %s42
      %s111 = ssub.s32 %s109, %s110
      %p112 = scmp.eq.s32.totalorder %s111, 0
      %s114 = sadd.s32 %s113, 1
      %s115 = scalar_select %p112, %s113, %s114
      %p118 = pneg %p112
      %p119 = scmp.eq.s32.totalorder %s24, 1
      %p120 = por %p118, %p119
      %p121 = scmp.ne.s32.totalorder %s113, %s116
      %p122 = scmp.eq.s32.totalorder %s24, 0
      %p123 = por %p121, %p122
      %p124 = scmp.ne.s32.totalorder %s113, %s116
      %p125 = scmp.eq.s32.totalorder %s29, 1
      %p126 = por %p124, %p125
      %p127 = scmp.ne.s32.totalorder %s116, %s117
      %p128 = scmp.eq.s32.totalorder %s29, 0
      %p129 = por %p127, %p128
      %p130 = scmp.ne.s32.totalorder %s116, %s117
      %p131 = scmp.eq.s32.totalorder %s30, 1
      %p132 = por %p130, %p131
      %p134 = scmp.ne.s32.totalorder %s117, %s133
      %p135 = scmp.eq.s32.totalorder %s30, 0
      %p136 = por %p134, %p135
      %s137 = sadd.s32 %s31, %s33
      %s138 = sadd.s32 %s50, %s42
      %s139 = ssub.s32 %s137, %s138
      %p140 = scmp.eq.s32.totalorder %s139, 0
      %s142 = sadd.s32 %s141, 1
      %s143 = scalar_select %p140, %s141, %s142
      %p146 = pneg %p140
      %p147 = scmp.eq.s32.totalorder %s24, 1
      %p148 = por %p146, %p147
      %p149 = scmp.ne.s32.totalorder %s141, %s144
      %p150 = scmp.eq.s32.totalorder %s24, 0
      %p151 = por %p149, %p150
      %p152 = scmp.ne.s32.totalorder %s141, %s144
      %p153 = scmp.eq.s32.totalorder %s29, 1
      %p154 = por %p152, %p153
      %p155 = scmp.ne.s32.totalorder %s144, %s145
      %p156 = scmp.eq.s32.totalorder %s29, 0
      %p157 = por %p155, %p156
      %p158 = scmp.ne.s32.totalorder %s144, %s145
      %p159 = scmp.eq.s32.totalorder %s30, 1
      %p160 = por %p158, %p159
      %p162 = scmp.ne.s32.totalorder %s145, %s161
      %p163 = scmp.eq.s32.totalorder %s30, 0
      %p164 = por %p162, %p163
      %s165 = sadd.s32 %s31, %s33
      %s166 = sadd.s32 %s50, %s42
      %s167 = ssub.s32 %s165, %s166
      %p168 = scmp.eq.s32.totalorder %s167, 0
      %s170 = sadd.s32 %s169, 1
      %s171 = scalar_select %p168, %s169, %s170
      %p174 = pneg %p168
      %p175 = scmp.eq.s32.totalorder %s24, 1
      %p176 = por %p174, %p175
      %p177 = scmp.ne.s32.totalorder %s169, %s172
      %p178 = scmp.eq.s32.totalorder %s24, 0
      %p179 = por %p177, %p178
      %p180 = scmp.ne.s32.totalorder %s169, %s172
      %p181 = scmp.eq.s32.totalorder %s29, 1
      %p182 = por %p180, %p181
      %p183 = scmp.ne.s32.totalorder %s172, %s173
      %p184 = scmp.eq.s32.totalorder %s29, 0
      %p185 = por %p183, %p184
      %p186 = scmp.ne.s32.totalorder %s172, %s173
      %p187 = scmp.eq.s32.totalorder %s30, 1
      %p188 = por %p186, %p187
      %p190 = scmp.ne.s32.totalorder %s173, %s189
      %p191 = scmp.eq.s32.totalorder %s30, 0
      %p192 = por %p190, %p191
      %s193 = ssub.s32 %s31, %s50
      %s194 = ssub.s32 %s32, %s46
      %s195 = sor.u32 %s193, %s194
      %p196 = scmp.eq.s32.totalorder %s195, 0
      %s198 = sadd.s32 %s197, 1
      %s199 = scalar_select %p196, %s197, %s198
      %p202 = pneg %p196
      %p203 = scmp.eq.s32.totalorder %s24, 1
      %p204 = por %p202, %p203
      %p205 = scmp.ne.s32.totalorder %s197, %s200
      %p206 = scmp.eq.s32.totalorder %s24, 0
      %p207 = por %p205, %p206
      %p208 = scmp.ne.s32.totalorder %s197, %s200
      %p209 = scmp.eq.s32.totalorder %s29, 1
      %p210 = por %p208, %p209
      %p211 = scmp.ne.s32.totalorder %s200, %s201
      %p212 = scmp.eq.s32.totalorder %s29, 0
      %p213 = por %p211, %p212
      %p214 = scmp.ne.s32.totalorder %s200, %s201
      %p215 = scmp.eq.s32.totalorder %s30, 1
      %p216 = por %p214, %p215
      %p218 = scmp.ne.s32.totalorder %s201, %s217
      %p219 = scmp.eq.s32.totalorder %s30, 0
      %p220 = por %p218, %p219
      %p221 = scmp.le.s32.totalorder 1, %s24
      %p222 = scmp.lt.s32.totalorder %s24, 3
      %p223 = pnand %p221, %p222
      %p224 = pneg %p223
      // Predicated region
      $region9: #{tpu_custom_call.1} parent=5 // pred_check
        _
      $region10: #{tpu_custom_call.1} parent=5 // pred_check_branch
        %226 = sbr.rel (%p223) target = $region12
      $region11: #{tpu_custom_call.1} parent=5 // pred_region
        %s227 = ssub.s32 %s24, 1
      $region12: #{tpu_custom_call.1} parent=5 // pred_fallthru
        _
      %p228 = scmp.lt.s32.totalorder %s24, 2
      // Predicated region
      $region13: #{tpu_custom_call.1} parent=5 // pred_check
        %p229 = pneg %p228
      $region14: #{tpu_custom_call.1} parent=5 // pred_check_branch
        %231 = sbr.rel (%p229) target = $region16
      $region15: #{tpu_custom_call.1} parent=5 // pred_region
        // Predicated region
        $region17: #{tpu_custom_call.1} parent=15 // pred_check
          %p232 = pneg %p67
        $region18: #{tpu_custom_call.1} parent=15 // pred_check_branch
          %234 = sbr.rel (%p232) target = $region20
        $region19: #{tpu_custom_call.1} parent=15 // pred_region
          #allocation15 [shape = 'u32[6]{0}', space=smem, size = 0x18, scoped, tag = 'DMA stride descriptor']
          %s235 = sand.u32 %s57, 1
          %s236 = scalar_lea.sflag [#allocation5], %s235
          %s237 = sand.u32 %s57, 1
          %s238 = smul.addr %s237, 8
          %s239 = scalar_lea.vmem [#allocation4], %s238
          %s240 = sadd.s32 %s31, %s33
          %s241 = smul.u32 2, %s32
          %s243 = ssub.s32 128, 128
          %244 = vsyncadd %s236, %s243
          %s245 = smul.addr %s240, 2
          %s246 = sadd.s32 %s241, %s245
          %s247 = smul.addr %s246, 32
          %s248 = scalar_lea.hbm %s0, %s247
          %s250 = sshll.u32 1, 14
          %s251 = sxor.u32 4294967295, %s250
          %s253 = sld [smem:[#allocation0]]
          %s254 = sadd.s32 2, %s253
          %s256 = sshll.u32 7, 26
          %s257 = sxor.u32 4294967295, %s256
          %s258 = sand.u32 0, %s257
          %s259 = sshll.u32 %s254, 26
          %s260 = sor.u32 %s258, %s259
          %s261 = sshll.u32 %s239, 4
          %s262 = int_to_ptr.vmem [resolvable:$true] %s261
          %268 = sst [smem:[#allocation15]] 128
          %s269 = scalar_lea.smem [#allocation15], 1
          %270 = sst [smem:[%s269]] 64
          %s271 = scalar_lea.smem [#allocation15], 2
          %272 = sst [smem:[%s271]] 2
          %s273 = scalar_lea.smem [#allocation15], 3
          %274 = sst [smem:[%s273]] 32
          %s275 = scalar_lea.smem [#allocation15], 4
          %276 = sst [smem:[%s275]] 32
          %s277 = scalar_lea.smem [#allocation15], 5
          %278 = sst [smem:[%s277]] 2
          %280 = dma.general %s248, 128, %s262, %s236, [#allocation14], [#allocation15], %s260, 0
        $region20: #{tpu_custom_call.1} parent=15 // pred_fallthru
          _
        // Predicated region
        $region21: #{tpu_custom_call.1} parent=15 // pred_check
          %p281 = pneg %p95
        $region22: #{tpu_custom_call.1} parent=15 // pred_check_branch
          %283 = sbr.rel (%p281) target = $region24
        $region23: #{tpu_custom_call.1} parent=15 // pred_region
          #allocation17 [shape = 'u32[6]{0}', space=smem, size = 0x18, scoped, tag = 'DMA stride descriptor']
          %s284 = sand.u32 %s24, 1
          %s285 = scalar_lea.sflag [#allocation8], %s284
          %s286 = sand.u32 %s85, 1
          %s287 = smul.addr %s286, 8
          %s288 = scalar_lea.vmem [#allocation7], %s287
          %s289 = sadd.s32 %s31, %s33
          %s291 = ssub.s32 128, 128
          %292 = vsyncadd %s285, %s291
          %s293 = smul.addr %s289, 2
          %s294 = smul.addr %s293, 32
          %s295 = scalar_lea.hbm %s1, %s294
          %s297 = sshll.u32 1, 14
          %s298 = sxor.u32 4294967295, %s297
          %s300 = sld [smem:[#allocation0]]
          %s301 = sadd.s32 2, %s300
          %s303 = sshll.u32 7, 26
          %s304 = sxor.u32 4294967295, %s303
          %s305 = sand.u32 0, %s304
          %s306 = sshll.u32 %s301, 26
          %s307 = sor.u32 %s305, %s306
          %s308 = sshll.u32 %s288, 4
          %s309 = int_to_ptr.vmem [resolvable:$true] %s308
          %315 = sst [smem:[#allocation17]] 128
          %s316 = scalar_lea.smem [#allocation17], 1
          %317 = sst [smem:[%s316]] 64
          %s318 = scalar_lea.smem [#allocation17], 2
          %319 = sst [smem:[%s318]] 2
          %s320 = scalar_lea.smem [#allocation17], 3
          %321 = sst [smem:[%s320]] 32
          %s322 = scalar_lea.smem [#allocation17], 4
          %323 = sst [smem:[%s322]] 32
          %s324 = scalar_lea.smem [#allocation17], 5
          %325 = sst [smem:[%s324]] 2
          %327 = dma.general %s295, 128, %s309, %s285, [#allocation16], [#allocation17], %s307, 0
        $region24: #{tpu_custom_call.1} parent=15 // pred_fallthru
          _
        // Predicated region
        $region25: #{tpu_custom_call.1} parent=15 // pred_check
          %p328 = pneg %p123
        $region26: #{tpu_custom_call.1} parent=15 // pred_check_branch
          %330 = sbr.rel (%p328) target = $region28
        $region27: #{tpu_custom_call.1} parent=15 // pred_region
          #allocation19 [shape = 'u32[6]{0}', space=smem, size = 0x18, scoped, tag = 'DMA stride descriptor']
          %s331 = sand.u32 %s24, 1
          %s332 = scalar_lea.sflag [#allocation8], %s331
          %s333 = sand.u32 %s113, 1
          %s334 = smul.addr %s333, 8
          %s335 = scalar_lea.vmem [#allocation9], %s334
          %s336 = sadd.s32 %s31, %s33
          %s338 = ssub.s32 128, 128
          %339 = vsyncadd %s332, %s338
          %s340 = smul.addr %s336, 2
          %s341 = smul.addr %s340, 32
          %s342 = scalar_lea.hbm %s2, %s341
          %s344 = sshll.u32 1, 14
          %s345 = sxor.u32 4294967295, %s344
          %s347 = sld [smem:[#allocation0]]
          %s348 = sadd.s32 2, %s347
          %s350 = sshll.u32 7, 26
          %s351 = sxor.u32 4294967295, %s350
          %s352 = sand.u32 0, %s351
          %s353 = sshll.u32 %s348, 26
          %s354 = sor.u32 %s352, %s353
          %s355 = sshll.u32 %s335, 4
          %s356 = int_to_ptr.vmem [resolvable:$true] %s355
          %362 = sst [smem:[#allocation19]] 128
          %s363 = scalar_lea.smem [#allocation19], 1
          %364 = sst [smem:[%s363]] 64
          %s365 = scalar_lea.smem [#allocation19], 2
          %366 = sst [smem:[%s365]] 2
          %s367 = scalar_lea.smem [#allocation19], 3
          %368 = sst [smem:[%s367]] 32
          %s369 = scalar_lea.smem [#allocation19], 4
          %370 = sst [smem:[%s369]] 32
          %s371 = scalar_lea.smem [#allocation19], 5
          %372 = sst [smem:[%s371]] 2
          %374 = dma.general %s342, 128, %s356, %s332, [#allocation18], [#allocation19], %s354, 0
        $region28: #{tpu_custom_call.1} parent=15 // pred_fallthru
          _
        // Predicated region
        $region29: #{tpu_custom_call.1} parent=15 // pred_check
          %p375 = pneg %p151
        $region30: #{tpu_custom_call.1} parent=15 // pred_check_branch
          %377 = sbr.rel (%p375) target = $region32
        $region31: #{tpu_custom_call.1} parent=15 // pred_region
          #allocation21 [shape = 'u32[6]{0}', space=smem, size = 0x18, scoped, tag = 'DMA stride descriptor']
          %s378 = sand.u32 %s24, 1
          %s379 = scalar_lea.sflag [#allocation11], %s378
          %s380 = sand.u32 %s141, 1
          %s381 = smul.addr %s380, 8
          %s382 = scalar_lea.vmem [#allocation10], %s381
          %s383 = sadd.s32 %s31, %s33
          %s385 = ssub.s32 128, 128
          %386 = vsyncadd %s379, %s385
          %s387 = smul.addr %s383, 2
          %s388 = smul.addr %s387, 32
          %s389 = scalar_lea.hbm %s3, %s388
          %s391 = sshll.u32 1, 14
          %s392 = sxor.u32 4294967295, %s391
          %s394 = sld [smem:[#allocation0]]
          %s395 = sadd.s32 2, %s394
          %s397 = sshll.u32 7, 26
          %s398 = sxor.u32 4294967295, %s397
          %s399 = sand.u32 0, %s398
          %s400 = sshll.u32 %s395, 26
          %s401 = sor.u32 %s399, %s400
          %s402 = sshll.u32 %s382, 4
          %s403 = int_to_ptr.vmem [resolvable:$true] %s402
          %409 = sst [smem:[#allocation21]] 128
          %s410 = scalar_lea.smem [#allocation21], 1
          %411 = sst [smem:[%s410]] 64
          %s412 = scalar_lea.smem [#allocation21], 2
          %413 = sst [smem:[%s412]] 2
          %s414 = scalar_lea.smem [#allocation21], 3
          %415 = sst [smem:[%s414]] 32
          %s416 = scalar_lea.smem [#allocation21], 4
          %417 = sst [smem:[%s416]] 32
          %s418 = scalar_lea.smem [#allocation21], 5
          %419 = sst [smem:[%s418]] 2
          %421 = dma.general %s389, 128, %s403, %s379, [#allocation20], [#allocation21], %s401, 0
        $region32: #{tpu_custom_call.1} parent=15 // pred_fallthru
          _
        // Predicated region
        $region33: #{tpu_custom_call.1} parent=15 // pred_check
          %p422 = pneg %p179
        $region34: #{tpu_custom_call.1} parent=15 // pred_check_branch
          %424 = sbr.rel (%p422) target = $region36
        $region35: #{tpu_custom_call.1} parent=15 // pred_region
          #allocation23 [shape = 'u32[6]{0}', space=smem, size = 0x18, scoped, tag = 'DMA stride descriptor']
          %s425 = sand.u32 %s24, 1
          %s426 = scalar_lea.sflag [#allocation11], %s425
          %s427 = sand.u32 %s169, 1
          %s428 = smul.addr %s427, 16
          %s429 = scalar_lea.vmem [#allocation12], %s428
          %s430 = sadd.s32 %s31, %s33
          %s432 = ssub.s32 256, 256
          %433 = vsyncadd %s426, %s432
          %s434 = smul.addr %s430, 4
          %s435 = smul.addr %s434, 32
          %s436 = scalar_lea.hbm %s4, %s435
          %s438 = sshll.u32 1, 14
          %s439 = sxor.u32 4294967295, %s438
          %s441 = sld [smem:[#allocation0]]
          %s442 = sadd.s32 2, %s441
          %s444 = sshll.u32 7, 26
          %s445 = sxor.u32 4294967295, %s444
          %s446 = sand.u32 0, %s445
          %s447 = sshll.u32 %s442, 26
          %s448 = sor.u32 %s446, %s447
          %s449 = sshll.u32 %s429, 4
          %s450 = int_to_ptr.vmem [resolvable:$true] %s449
          %456 = sst [smem:[#allocation23]] 256
          %s457 = scalar_lea.smem [#allocation23], 1
          %458 = sst [smem:[%s457]] 128
          %s459 = scalar_lea.smem [#allocation23], 2
          %460 = sst [smem:[%s459]] 4
          %s461 = scalar_lea.smem [#allocation23], 3
          %462 = sst [smem:[%s461]] 32
          %s463 = scalar_lea.smem [#allocation23], 4
          %464 = sst [smem:[%s463]] 32
          %s465 = scalar_lea.smem [#allocation23], 5
          %466 = sst [smem:[%s465]] 2
          %468 = dma.general %s436, 256, %s450, %s426, [#allocation22], [#allocation23], %s448, 0
        $region36: #{tpu_custom_call.1} parent=15 // pred_fallthru
          _
      $region16: #{tpu_custom_call.1} parent=5 // pred_fallthru
        _
      %p469 = scmp.le.s32.totalorder 1, %s24
      %p470 = scmp.lt.s32.totalorder %s24, 3
      %p471 = pnand %p469, %p470
      %p472 = pneg %p471
      // Predicated region
      $region37: #{tpu_custom_call.1} parent=5 // pred_check
        _
      $region38: #{tpu_custom_call.1} parent=5 // pred_check_branch
        %474 = sbr.rel (%p471) target = $region40
      $region39: #{tpu_custom_call.1} parent=5 // pred_region
        %s475 = ssub.s32 %s24, 1
        %s476 = sand.u32 %s60, 1
        %s477 = scalar_lea.sflag [#allocation5], %s476
        %s478 = sand.u32 %s60, 1
        %s479 = smul.addr %s478, 8
        %s480 = scalar_lea.vmem [#allocation4], %s479
        // Predicated region
        $region41: #{tpu_custom_call.1} parent=39 // pred_check
          %p481 = pneg %p73
        $region42: #{tpu_custom_call.1} parent=39 // pred_check_branch
          %483 = sbr.rel (%p481) target = $region44
        $region43: #{tpu_custom_call.1} parent=39 // pred_region
          %484 = dma.done %s477, 128
        $region44: #{tpu_custom_call.1} parent=39 // pred_fallthru
          _
        %s485 = sand.u32 %s29, 1
        %s486 = scalar_lea.sflag [#allocation8], %s485
        %s487 = sand.u32 %s88, 1
        %s488 = smul.addr %s487, 8
        %s489 = scalar_lea.vmem [#allocation7], %s488
        // Predicated region
        $region45: #{tpu_custom_call.1} parent=39 // pred_check
          %p490 = pneg %p101
        $region46: #{tpu_custom_call.1} parent=39 // pred_check_branch
          %492 = sbr.rel (%p490) target = $region48
        $region47: #{tpu_custom_call.1} parent=39 // pred_region
          %493 = dma.done %s486, 128
        $region48: #{tpu_custom_call.1} parent=39 // pred_fallthru
          _
        %s494 = sand.u32 %s29, 1
        %s495 = scalar_lea.sflag [#allocation8], %s494
        %s496 = sand.u32 %s116, 1
        %s497 = smul.addr %s496, 8
        %s498 = scalar_lea.vmem [#allocation9], %s497
        // Predicated region
        $region49: #{tpu_custom_call.1} parent=39 // pred_check
          %p499 = pneg %p129
        $region50: #{tpu_custom_call.1} parent=39 // pred_check_branch
          %501 = sbr.rel (%p499) target = $region52
        $region51: #{tpu_custom_call.1} parent=39 // pred_region
          %502 = dma.done %s495, 128
        $region52: #{tpu_custom_call.1} parent=39 // pred_fallthru
          _
        %s503 = sand.u32 %s29, 1
        %s504 = scalar_lea.sflag [#allocation11], %s503
        %s505 = sand.u32 %s144, 1
        %s506 = smul.addr %s505, 8
        %s507 = scalar_lea.vmem [#allocation10], %s506
        // Predicated region
        $region53: #{tpu_custom_call.1} parent=39 // pred_check
          %p508 = pneg %p157
        $region54: #{tpu_custom_call.1} parent=39 // pred_check_branch
          %510 = sbr.rel (%p508) target = $region56
        $region55: #{tpu_custom_call.1} parent=39 // pred_region
          %511 = dma.done %s504, 128
        $region56: #{tpu_custom_call.1} parent=39 // pred_fallthru
          _
        %s512 = sand.u32 %s29, 1
        %s513 = scalar_lea.sflag [#allocation11], %s512
        %s514 = sand.u32 %s172, 1
        %s515 = smul.addr %s514, 16
        %s516 = scalar_lea.vmem [#allocation12], %s515
        // Predicated region
        $region57: #{tpu_custom_call.1} parent=39 // pred_check
          %p517 = pneg %p185
        $region58: #{tpu_custom_call.1} parent=39 // pred_check_branch
          %519 = sbr.rel (%p517) target = $region60
        $region59: #{tpu_custom_call.1} parent=39 // pred_region
          %520 = dma.done %s513, 256
        $region60: #{tpu_custom_call.1} parent=39 // pred_fallthru
          _
        %s521 = sand.u32 %s60, 1
        %s522 = scalar_lea.sflag [#allocation5], %s521
        %s523 = sand.u32 %s60, 1
        %s524 = smul.addr %s523, 8
        %s525 = scalar_lea.vmem [#allocation4], %s524
        %p526 = pneg %p73
        %p527 = pneg %p70
        %s528 = sand.u32 %s29, 1
        %s529 = scalar_lea.sflag [#allocation8], %s528
        %s530 = sand.u32 %s88, 1
        %s531 = smul.addr %s530, 8
        %s532 = scalar_lea.vmem [#allocation7], %s531
        %p533 = pneg %p101
        %p534 = pneg %p98
        %s535 = sand.u32 %s29, 1
        %s536 = scalar_lea.sflag [#allocation8], %s535
        %s537 = sand.u32 %s116, 1
        %s538 = smul.addr %s537, 8
        %s539 = scalar_lea.vmem [#allocation9], %s538
        %p540 = pneg %p129
        %p541 = pneg %p126
        %s542 = sand.u32 %s29, 1
        %s543 = scalar_lea.sflag [#allocation11], %s542
        %s544 = sand.u32 %s144, 1
        %s545 = smul.addr %s544, 8
        %s546 = scalar_lea.vmem [#allocation10], %s545
        %p547 = pneg %p157
        %p548 = pneg %p154
        %s549 = sand.u32 %s29, 1
        %s550 = scalar_lea.sflag [#allocation11], %s549
        %s551 = sand.u32 %s172, 1
        %s552 = smul.addr %s551, 16
        %s553 = scalar_lea.vmem [#allocation12], %s552
        %p554 = pneg %p185
        %p555 = pneg %p182
        %p556 = pneg %p213
        %p557 = pneg %p210
        %s558 = sand.u32 %s200, 1
        %s559 = scalar_lea.sflag [#allocation6], %s558
        %s560 = sand.u32 %s200, 1
        %s561 = smul.addr %s560, 16
        %s562 = scalar_lea.vmem [#allocation13], %s561
        %s563 = sadd.s32 %s34, %s36
        %s564 = smul.u32 2, %s35
        %s565 = sadd.s32 %s34, %s36
        %s566 = sadd.s32 %s34, %s36
        %s567 = sadd.s32 %s34, %s36
        %s568 = sadd.s32 %s34, %s36
        %s569 = smul.u32 2, %s35
        %p571 = scmp.eq.s32.totalorder %s36, 0
        // Predicated region
        $region61: #{tpu_custom_call.1} parent=39 // pred_check
          %p572 = pneg %p571
        $region62: #{tpu_custom_call.1} parent=39 // pred_check_branch
          %574 = sbr.rel (%p572) target = $region64
        $region63: #{tpu_custom_call.1} parent=39 // pred_region
          // Predicated region
          $region65: #{tpu_custom_call.1} parent=63 // pred_check
            _
          $region66: #{tpu_custom_call.1} parent=63 // pred_check_branch
            %576 = sbr.rel target = $region68
          $region67: #{tpu_custom_call.1} parent=63 // pred_region
            %577 = sst [smem:[#allocation26]] [#allocation25]
            %578 = sst [smem:[#allocation27]] [#allocation24]
          $region68: #{tpu_custom_call.1} parent=63 // pred_fallthru
            _
          %580 = shalt.err (0)
          %s582 = sshll.u32 [#allocation2], 4
          %s583 = int_to_ptr.vmem [resolvable:$true] %s582
          %585 = dma.hbm_to_vmem [thread:$0]  %s5, 4096, %s583, [#allocation3]
          %s586 = smul.u32 4, 4
          %s587 = smul.u32 %s586, 16
          %s588 = smul.u32 %s587, 1
          %s589 = sshll.u32 %s588, 4
          %590 = dma.done [#allocation3], %s589
          %591 = vst [vmem:[%s562] sm:$0xf] 0.0
          %592 = vst [vmem:[%s562 + $0x4] sm:$0xf] 0.0
          %593 = vst [vmem:[%s562 + $0x8] sm:$0xf] 0.0
          %594 = vst [vmem:[%s562 + $0xc] sm:$0xf] 0.0
        $region64: #{tpu_custom_call.1} parent=39 // pred_fallthru
          _
        %v595 = vld [vmem:[%s480] sm:$0x3]
        %v596 = vld [vmem:[%s480 + $0x2] sm:$0x3]
        %s597 = scalar_lea.vmem %s480, 4 [#allocation4]
        %v598 = vld [vmem:[%s597] sm:$0x3]
        %v599 = vld [vmem:[%s597 + $0x2] sm:$0x3]
        %v600 = vld [vmem:[%s489] sm:$0x3]
        %v601 = vld [vmem:[%s489 + $0x2] sm:$0x3]
        %s602 = scalar_lea.vmem %s489, 4 [#allocation7]
        %v603 = vld [vmem:[%s602] sm:$0x3]
        %v604 = vld [vmem:[%s602 + $0x2] sm:$0x3]
        %v605 = vlaneseq
        %v606 = vshrl.u32 %v605, 7
        %v607 = vsub.s32 0, %v606
        %v608 = vrot.slane %v595, %v607
        %v609 = vlaneseq
        %v610 = vshrl.u32 %v609, 7
        %v611 = vsub.s32 0, %v610
        %v612 = vrot.slane %v596, %v611
        %v613 = vmul.f32 %v608, %v600
        %v614 = vmul.f32 %v612, %v600
        %v615 = vadd.f32 %v613, 0.0
        %v616 = vadd.f32 %v614, 0.0
        %v617 = vlaneseq
        %v618 = vshrl.u32 %v617, 7
        %v619 = vsub.s32 0, %v618
        %v620 = vrot.slane %v598, %v619
        %v621 = vlaneseq
        %v622 = vshrl.u32 %v621, 7
        %v623 = vsub.s32 0, %v622
        %v624 = vrot.slane %v599, %v623
        %v625 = vmul.f32 %v620, %v603
        %v626 = vmul.f32 %v624, %v603
        %v627 = vsub.f32 %v615, %v625
        %v628 = vsub.f32 %v616, %v626
        %v629 = vmul.f32 %v608, %v603
        %v630 = vmul.f32 %v612, %v603
        %v631 = vadd.f32 %v629, 0.0
        %v632 = vadd.f32 %v630, 0.0
        %v633 = vmul.f32 %v620, %v600
        %v634 = vmul.f32 %v624, %v600
        %v635 = vadd.f32 %v631, %v633
        %v636 = vadd.f32 %v632, %v634
        %v637 = vlaneseq
        %v638 = vshrl.u32 %v637, 7
        %v639 = vsub.s32 1, %v638
        %v640 = vrot.slane %v595, %v639
        %v641 = vlaneseq
        %v642 = vshrl.u32 %v641, 7
        %v643 = vsub.s32 1, %v642
        %v644 = vrot.slane %v596, %v643
        %v645 = vmul.f32 %v640, %v601
        %v646 = vmul.f32 %v644, %v601
        %v647 = vadd.f32 %v627, %v645
        %v648 = vadd.f32 %v628, %v646
        %v649 = vlaneseq
        %v650 = vshrl.u32 %v649, 7
        %v651 = vsub.s32 1, %v650
        %v652 = vrot.slane %v598, %v651
        %v653 = vlaneseq
        %v654 = vshrl.u32 %v653, 7
        %v655 = vsub.s32 1, %v654
        %v656 = vrot.slane %v599, %v655
        %v657 = vmul.f32 %v652, %v604
        %v658 = vmul.f32 %v656, %v604
        %v659 = vsub.f32 %v647, %v657
        %v660 = vsub.f32 %v648, %v658
        %v661 = vmul.f32 %v640, %v604
        %v662 = vmul.f32 %v644, %v604
        %v663 = vadd.f32 %v635, %v661
        %v664 = vadd.f32 %v636, %v662
        %v665 = vmul.f32 %v652, %v601
        %v666 = vmul.f32 %v656, %v601
        %v667 = vadd.f32 %v663, %v665
        %v668 = vadd.f32 %v664, %v666
        %v669 = vld [vmem:[%s498] sm:$0x3]
        %v670 = vld [vmem:[%s498 + $0x2] sm:$0x3]
        %s671 = scalar_lea.vmem %s498, 4 [#allocation9]
        %v672 = vld [vmem:[%s671] sm:$0x3]
        %v673 = vld [vmem:[%s671 + $0x2] sm:$0x3]
        %v674 = vmul.f32 %v608, %v669
        %v675 = vmul.f32 %v612, %v669
        %v676 = vadd.f32 %v674, 0.0
        %v677 = vadd.f32 %v675, 0.0
        %v678 = vmul.f32 %v620, %v672
        %v679 = vmul.f32 %v624, %v672
        %v680 = vsub.f32 %v676, %v678
        %v681 = vsub.f32 %v677, %v679
        %v682 = vmul.f32 %v608, %v672
        %v683 = vmul.f32 %v612, %v672
        %v684 = vadd.f32 %v682, 0.0
        %v685 = vadd.f32 %v683, 0.0
        %v686 = vmul.f32 %v620, %v669
        %v687 = vmul.f32 %v624, %v669
        %v688 = vadd.f32 %v684, %v686
        %v689 = vadd.f32 %v685, %v687
        %v690 = vmul.f32 %v640, %v670
        %v691 = vmul.f32 %v644, %v670
        %v692 = vadd.f32 %v680, %v690
        %v693 = vadd.f32 %v681, %v691
        %v694 = vmul.f32 %v652, %v673
        %v695 = vmul.f32 %v656, %v673
        %v696 = vsub.f32 %v692, %v694
        %v697 = vsub.f32 %v693, %v695
        %v698 = vmul.f32 %v640, %v673
        %v699 = vmul.f32 %v644, %v673
        %v700 = vadd.f32 %v688, %v698
        %v701 = vadd.f32 %v689, %v699
        %v702 = vmul.f32 %v652, %v670
        %v703 = vmul.f32 %v656, %v670
        %v704 = vadd.f32 %v700, %v702
        %v705 = vadd.f32 %v701, %v703
        %v706 = vld [vmem:[%s507] sm:$0x3]
        %v707 = vld [vmem:[%s507 + $0x2] sm:$0x3]
        %s708 = scalar_lea.vmem %s507, 4 [#allocation10]
        %v709 = vld [vmem:[%s708] sm:$0x3]
        %v710 = vld [vmem:[%s708 + $0x2] sm:$0x3]
        %v711 = vmul.f32 %v608, %v706
        %v712 = vmul.f32 %v612, %v706
        %v713 = vadd.f32 %v711, 0.0
        %v714 = vadd.f32 %v712, 0.0
        %v715 = vmul.f32 %v620, %v709
        %v716 = vmul.f32 %v624, %v709
        %v717 = vsub.f32 %v713, %v715
        %v718 = vsub.f32 %v714, %v716
        %v719 = vmul.f32 %v608, %v709
        %v720 = vmul.f32 %v612, %v709
        %v721 = vadd.f32 %v719, 0.0
        %v722 = vadd.f32 %v720, 0.0
        %v723 = vmul.f32 %v620, %v706
        %v724 = vmul.f32 %v624, %v706
        %v725 = vadd.f32 %v721, %v723
        %v726 = vadd.f32 %v722, %v724
        %v727 = vmul.f32 %v640, %v707
        %v728 = vmul.f32 %v644, %v707
        %v729 = vadd.f32 %v717, %v727
        %v730 = vadd.f32 %v718, %v728
        %v731 = vmul.f32 %v652, %v710
        %v732 = vmul.f32 %v656, %v710
        %v733 = vsub.f32 %v729, %v731
        %v734 = vsub.f32 %v730, %v732
        %v735 = vmul.f32 %v640, %v710
        %v736 = vmul.f32 %v644, %v710
        %v737 = vadd.f32 %v725, %v735
        %v738 = vadd.f32 %v726, %v736
        %v739 = vmul.f32 %v652, %v707
        %v740 = vmul.f32 %v656, %v707
        %v741 = vadd.f32 %v737, %v739
        %v742 = vadd.f32 %v738, %v740
        %v743 = vmul.f32 %v659, %v696
        %v744 = vmul.f32 %v660, %v697
        %v745 = vmul.f32 %v667, %v704
        %v746 = vmul.f32 %v668, %v705
        %v747 = vadd.f32 %v743, %v745
        %v748 = vadd.f32 %v744, %v746
        %v749 = vmul.f32 %v667, %v696
        %v750 = vmul.f32 %v668, %v697
        %v751 = vmul.f32 %v659, %v704
        %v752 = vmul.f32 %v660, %v705
        %v753 = vsub.f32 %v749, %v751
        %v754 = vsub.f32 %v750, %v752
        %v757 = vcombine.low %v747, %v748
        %v759 = vunpack.c.l.s4 1983009808
        %v760 = vunpack.c.0.s8 %v759
        %v761 = vlaneseq
        %v762 = vshrl.u32 %v761, 7
        %v763 = vsub.s32 %v760, %v762
        %v764 = vrot.slane %v757, %v763
        %v766 = vpack.c.bf16 %v764, %v764
        %v767 = vunpack.c.l.bf16 %v766
        %v770 = vunpack.c.l.s4 1983009808
        %v771 = vunpack.c.0.s8 %v770
        %v772 = vlaneseq
        %v773 = vshrl.u32 %v772, 7
        %v774 = vsub.s32 %v771, %v773
        %v775 = vrot.slane %v767, %v774
        %v776 = vcombine.high %v775, %v775
        %v779 = vsub.f32 %v747, %v775
        %v780 = vsub.f32 %v748, %v776
        %v783 = vcombine.low %v779, %v780
        %v785 = vunpack.c.l.s4 1983009808
        %v786 = vunpack.c.0.s8 %v785
        %v787 = vlaneseq
        %v788 = vshrl.u32 %v787, 7
        %v789 = vsub.s32 %v786, %v788
        %v790 = vrot.slane %v783, %v789
        %v792 = vpack.c.bf16 %v790, %v790
        %v795 = vcombine.low %v753, %v754
        %v797 = vunpack.c.l.s4 1983009808
        %v798 = vunpack.c.0.s8 %v797
        %v799 = vlaneseq
        %v800 = vshrl.u32 %v799, 7
        %v801 = vsub.s32 %v798, %v800
        %v802 = vrot.slane %v795, %v801
        %v804 = vpack.c.bf16 %v802, %v802
        %v805 = vunpack.c.l.bf16 %v804
        %v808 = vunpack.c.l.s4 1983009808
        %v809 = vunpack.c.0.s8 %v808
        %v810 = vlaneseq
        %v811 = vshrl.u32 %v810, 7
        %v812 = vsub.s32 %v809, %v811
        %v813 = vrot.slane %v805, %v812
        %v814 = vcombine.high %v813, %v813
        %v817 = vsub.f32 %v753, %v813
        %v818 = vsub.f32 %v754, %v814
        %v821 = vcombine.low %v817, %v818
        %v823 = vunpack.c.l.s4 1983009808
        %v824 = vunpack.c.0.s8 %v823
        %v825 = vlaneseq
        %v826 = vshrl.u32 %v825, 7
        %v827 = vsub.s32 %v824, %v826
        %v828 = vrot.slane %v821, %v827
        %v830 = vpack.c.bf16 %v828, %v828
        %v831 = vld [vmem:[#allocation2] sm:$0xff]
        %v832 = vld [vmem:[#allocation2 + $0x8] sm:$0xff]
        %v833 = vld [vmem:[#allocation2 + $0x10] sm:$0xff]
        %v834 = vld [vmem:[#allocation2 + $0x18] sm:$0xff]
        %v835 = vld [vmem:[#allocation2 + $0x20] sm:$0xff]
        %v836 = vld [vmem:[#allocation2 + $0x28] sm:$0xff]
        %v837 = vld [vmem:[#allocation2 + $0x30] sm:$0xff]
        %v838 = vld [vmem:[#allocation2 + $0x38] sm:$0xff]
        %s839 = scalar_lea.vmem [#allocation2], 64
        %v840 = vld [vmem:[%s839] sm:$0xff]
        %v841 = vld [vmem:[%s839 + $0x8] sm:$0xff]
        %v842 = vld [vmem:[%s839 + $0x10] sm:$0xff]
        %v843 = vld [vmem:[%s839 + $0x18] sm:$0xff]
        %v844 = vld [vmem:[%s839 + $0x20] sm:$0xff]
        %v845 = vld [vmem:[%s839 + $0x28] sm:$0xff]
        %v846 = vld [vmem:[%s839 + $0x30] sm:$0xff]
        %v847 = vld [vmem:[%s839 + $0x38] sm:$0xff]
        %848 = vmatprep.subr.bf16.mxu0 0
        %849 = vmatpush1.bf16.msra.mxu0 %v831
        %850 = vmatprep.subr.bf16.mxu0 0
        %851 = vmatpush1.bf16.msra.mxu0 %v832
        %852 = vmatprep.subr.bf16.mxu0 0
        %853 = vmatpush1.bf16.msra.mxu0 %v833
        %854 = vmatprep.subr.bf16.mxu0 0
        %855 = vmatpush1.bf16.msra.mxu0 %v834
        %856 = vmatprep.subr.bf16.mxu0 0
        %857 = vmatpush1.bf16.msra.mxu0 %v835
        %858 = vmatprep.subr.bf16.mxu0 0
        %859 = vmatpush1.bf16.msra.mxu0 %v836
        %860 = vmatprep.subr.bf16.mxu0 0
        %861 = vmatpush1.bf16.msra.mxu0 %v837
        %862 = vmatprep.subr.bf16.mxu0 0
        %863 = vmatpush1.bf16.msra.mxu0 %v838
        %864 = vmatprep.subr.bf16.mxu0 0
        %865 = vmatpush1.bf16.msra.mxu0 0
        %866 = vmatprep.subr.bf16.mxu0 0
        %867 = vmatpush1.bf16.msra.mxu0 0
        %868 = vmatprep.subr.bf16.mxu0 0
        %869 = vmatpush1.bf16.msra.mxu0 0
        %870 = vmatprep.subr.bf16.mxu0 0
        %871 = vmatpush1.bf16.msra.mxu0 0
        %872 = vmatprep.subr.bf16.mxu0 0
        %873 = vmatpush1.bf16.msra.mxu0 0
        %874 = vmatprep.subr.bf16.mxu0 0
        %875 = vmatpush1.bf16.msra.mxu0 0
        %876 = vmatprep.subr.bf16.mxu0 0
        %877 = vmatpush1.bf16.msra.mxu0 0
        %878 = vmatprep.subr.bf16.mxu0 0
        %879 = vmatpush1.bf16.msra.mxu0 0
        %880 = vmatprep.mubr.bf16.mxu0 0
        %881 = vmatmul.mubr.bf16.gmra.mrb[0].mxu0 %v792
        %v882 = vpop.f32.mrb[0].mxu0
        %v883 = vadd.f32 0.0, %v882
        %v884 = vpop.f32.mrb[0].mxu0
        %v885 = vpop.f32.mrb[0].mxu0
        %v886 = vpop.f32.mrb[0].mxu0
        %887 = vdwg.mxu0
        %888 = vmatprep.subr.bf16.mxu0 0
        %889 = vmatpush1.bf16.msra.mxu0 %v831
        %890 = vmatprep.subr.bf16.mxu0 0
        %891 = vmatpush1.bf16.msra.mxu0 %v832
        %892 = vmatprep.subr.bf16.mxu0 0
        %893 = vmatpush1.bf16.msra.mxu0 %v833
        %894 = vmatprep.subr.bf16.mxu0 0
        %895 = vmatpush1.bf16.msra.mxu0 %v834
        %896 = vmatprep.subr.bf16.mxu0 0
        %897 = vmatpush1.bf16.msra.mxu0 %v835
        %898 = vmatprep.subr.bf16.mxu0 0
        %899 = vmatpush1.bf16.msra.mxu0 %v836
        %900 = vmatprep.subr.bf16.mxu0 0
        %901 = vmatpush1.bf16.msra.mxu0 %v837
        %902 = vmatprep.subr.bf16.mxu0 0
        %903 = vmatpush1.bf16.msra.mxu0 %v838
        %904 = vmatprep.subr.bf16.mxu0 0
        %905 = vmatpush1.bf16.msra.mxu0 0
        %906 = vmatprep.subr.bf16.mxu0 0
        %907 = vmatpush1.bf16.msra.mxu0 0
        %908 = vmatprep.subr.bf16.mxu0 0
        %909 = vmatpush1.bf16.msra.mxu0 0
        %910 = vmatprep.subr.bf16.mxu0 0
        %911 = vmatpush1.bf16.msra.mxu0 0
        %912 = vmatprep.subr.bf16.mxu0 0
        %913 = vmatpush1.bf16.msra.mxu0 0
        %914 = vmatprep.subr.bf16.mxu0 0
        %915 = vmatpush1.bf16.msra.mxu0 0
        %916 = vmatprep.subr.bf16.mxu0 0
        %917 = vmatpush1.bf16.msra.mxu0 0
        %918 = vmatprep.subr.bf16.mxu0 0
        %919 = vmatpush1.bf16.msra.mxu0 0
        %920 = vmatprep.mubr.bf16.mxu0 0
        %921 = vmatmul.mubr.bf16.gmra.mrb[0].mxu0 %v766
        %v922 = vpop.f32.mrb[0].mxu0
        %v923 = vadd.f32 %v883, %v922
        %v924 = vpop.f32.mrb[0].mxu0
        %v925 = vpop.f32.mrb[0].mxu0
        %v926 = vpop.f32.mrb[0].mxu0
        %927 = vdwg.mxu0
        %928 = vmatprep.subr.bf16.mxu0 0
        %929 = vmatpush1.bf16.msra.mxu0 %v840
        %930 = vmatprep.subr.bf16.mxu0 0
        %931 = vmatpush1.bf16.msra.mxu0 %v841
        %932 = vmatprep.subr.bf16.mxu0 0
        %933 = vmatpush1.bf16.msra.mxu0 %v842
        %934 = vmatprep.subr.bf16.mxu0 0
        %935 = vmatpush1.bf16.msra.mxu0 %v843
        %936 = vmatprep.subr.bf16.mxu0 0
        %937 = vmatpush1.bf16.msra.mxu0 %v844
        %938 = vmatprep.subr.bf16.mxu0 0
        %939 = vmatpush1.bf16.msra.mxu0 %v845
        %940 = vmatprep.subr.bf16.mxu0 0
        %941 = vmatpush1.bf16.msra.mxu0 %v846
        %942 = vmatprep.subr.bf16.mxu0 0
        %943 = vmatpush1.bf16.msra.mxu0 %v847
        %944 = vmatprep.subr.bf16.mxu0 0
        %945 = vmatpush1.bf16.msra.mxu0 0
        %946 = vmatprep.subr.bf16.mxu0 0
        %947 = vmatpush1.bf16.msra.mxu0 0
        %948 = vmatprep.subr.bf16.mxu0 0
        %949 = vmatpush1.bf16.msra.mxu0 0
        %950 = vmatprep.subr.bf16.mxu0 0
        %951 = vmatpush1.bf16.msra.mxu0 0
        %952 = vmatprep.subr.bf16.mxu0 0
        %953 = vmatpush1.bf16.msra.mxu0 0
        %954 = vmatprep.subr.bf16.mxu0 0
        %955 = vmatpush1.bf16.msra.mxu0 0
        %956 = vmatprep.subr.bf16.mxu0 0
        %957 = vmatpush1.bf16.msra.mxu0 0
        %958 = vmatprep.subr.bf16.mxu0 0
        %959 = vmatpush1.bf16.msra.mxu0 0
        %960 = vmatprep.mubr.bf16.mxu0 0
        %961 = vmatmul.mubr.bf16.gmra.mrb[0].mxu0 %v804
        %v962 = vpop.f32.mrb[0].mxu0
        %v963 = vadd.f32 0.0, %v962
        %v964 = vpop.f32.mrb[0].mxu0
        %v965 = vpop.f32.mrb[0].mxu0
        %v966 = vpop.f32.mrb[0].mxu0
        %967 = vdwg.mxu0
        %v968 = vsub.f32 %v923, %v963
        %969 = vmatprep.subr.bf16.mxu0 0
        %970 = vmatpush1.bf16.msra.mxu0 %v840
        %971 = vmatprep.subr.bf16.mxu0 0
        %972 = vmatpush1.bf16.msra.mxu0 %v841
        %973 = vmatprep.subr.bf16.mxu0 0
        %974 = vmatpush1.bf16.msra.mxu0 %v842
        %975 = vmatprep.subr.bf16.mxu0 0
        %976 = vmatpush1.bf16.msra.mxu0 %v843
        %977 = vmatprep.subr.bf16.mxu0 0
        %978 = vmatpush1.bf16.msra.mxu0 %v844
        %979 = vmatprep.subr.bf16.mxu0 0
        %980 = vmatpush1.bf16.msra.mxu0 %v845
        %981 = vmatprep.subr.bf16.mxu0 0
        %982 = vmatpush1.bf16.msra.mxu0 %v846
        %983 = vmatprep.subr.bf16.mxu0 0
        %984 = vmatpush1.bf16.msra.mxu0 %v847
        %985 = vmatprep.subr.bf16.mxu0 0
        %986 = vmatpush1.bf16.msra.mxu0 0
        %987 = vmatprep.subr.bf16.mxu0 0
        %988 = vmatpush1.bf16.msra.mxu0 0
        %989 = vmatprep.subr.bf16.mxu0 0
        %990 = vmatpush1.bf16.msra.mxu0 0
        %991 = vmatprep.subr.bf16.mxu0 0
        %992 = vmatpush1.bf16.msra.mxu0 0
        %993 = vmatprep.subr.bf16.mxu0 0
        %994 = vmatpush1.bf16.msra.mxu0 0
        %995 = vmatprep.subr.bf16.mxu0 0
        %996 = vmatpush1.bf16.msra.mxu0 0
        %997 = vmatprep.subr.bf16.mxu0 0
        %998 = vmatpush1.bf16.msra.mxu0 0
        %999 = vmatprep.subr.bf16.mxu0 0
        %1000 = vmatpush1.bf16.msra.mxu0 0
        %1001 = vmatprep.mubr.bf16.mxu0 0
        %1002 = vmatmul.mubr.bf16.gmra.mrb[0].mxu0 %v830
        %v1003 = vpop.f32.mrb[0].mxu0
        %v1004 = vadd.f32 0.0, %v1003
        %v1005 = vpop.f32.mrb[0].mxu0
        %v1006 = vpop.f32.mrb[0].mxu0
        %v1007 = vpop.f32.mrb[0].mxu0
        %1008 = vdwg.mxu0
        %v1009 = vsub.f32 %v968, %v1004
        %v1010 = vlaneseq
        %v1011 = vand.u32 %v1010, 127
        %vm1012 = vcmp.lt.s32.totalorder %v1011, 28
        %v1013 = vsel %vm1012, %v1009, -1e+30
        %vm1014 = vcmask 1043456
        %v1015 = vsel %vm1014, %v1013, -inf
        %1016 = vmax.xlane.f32.xlu0 %v1015
        %v1017 = vpop.xlane.xlu0 %1016
        %v1018 = vsub.f32 %v1013, %v1017
        %v1019 = vmul.f32 %v1018, 1.442695
        %v1020 = vpow.pop %v1019
        %v1021 = vsel %vm1014, %v1020, 0.0
        %1022 = vadd.xlane.f32.xlu0 %v1021
        %v1023 = vpop.xlane.xlu0 %1022
        %v1024 = vrcp.pop %v1023
        %v1025 = vmul.f32 %v1020, %v1024
        %v1026 = vpack.c.bf16 %v1025, %v1025
        %s1027 = scalar_lea.vmem [#allocation2], 128
        %v1028 = vld [vmem:[%s1027] sm:$0xff]
        %v1029 = vld [vmem:[%s1027 + $0x8] sm:$0xff]
        %v1030 = vld [vmem:[%s1027 + $0x10] sm:$0xff]
        %v1031 = vld [vmem:[%s1027 + $0x18] sm:$0xff]
        %v1032 = vld [vmem:[%s1027 + $0x20] sm:$0xff]
        %v1033 = vld [vmem:[%s1027 + $0x28] sm:$0xff]
        %v1034 = vld [vmem:[%s1027 + $0x30] sm:$0xff]
        %v1035 = vld [vmem:[%s1027 + $0x38] sm:$0xff]
        %s1036 = scalar_lea.vmem [#allocation2], 192
        %v1037 = vld [vmem:[%s1036] sm:$0xff]
        %v1038 = vld [vmem:[%s1036 + $0x8] sm:$0xff]
        %v1039 = vld [vmem:[%s1036 + $0x10] sm:$0xff]
        %v1040 = vld [vmem:[%s1036 + $0x18] sm:$0xff]
        %v1041 = vld [vmem:[%s1036 + $0x20] sm:$0xff]
        %v1042 = vld [vmem:[%s1036 + $0x28] sm:$0xff]
        %v1043 = vld [vmem:[%s1036 + $0x30] sm:$0xff]
        %v1044 = vld [vmem:[%s1036 + $0x38] sm:$0xff]
        %1045 = vmatprep.subr.bf16.mxu0 0
        %1046 = vmatpush1.bf16.msra.mxu0 %v1028
        %1047 = vmatprep.subr.bf16.mxu0 0
        %1048 = vmatpush1.bf16.msra.mxu0 %v1029
        %1049 = vmatprep.subr.bf16.mxu0 0
        %1050 = vmatpush1.bf16.msra.mxu0 %v1030
        %1051 = vmatprep.subr.bf16.mxu0 0
        %1052 = vmatpush1.bf16.msra.mxu0 %v1031
        %1053 = vmatprep.subr.bf16.mxu0 0
        %1054 = vmatpush1.bf16.msra.mxu0 %v1032
        %1055 = vmatprep.subr.bf16.mxu0 0
        %1056 = vmatpush1.bf16.msra.mxu0 %v1033
        %1057 = vmatprep.subr.bf16.mxu0 0
        %1058 = vmatpush1.bf16.msra.mxu0 %v1034
        %1059 = vmatprep.subr.bf16.mxu0 0
        %1060 = vmatpush1.bf16.msra.mxu0 %v1035
        %1061 = vmatprep.subr.bf16.mxu0 0
        %1062 = vmatpush1.bf16.msra.mxu0 0
        %1063 = vmatprep.subr.bf16.mxu0 0
        %1064 = vmatpush1.bf16.msra.mxu0 0
        %1065 = vmatprep.subr.bf16.mxu0 0
        %1066 = vmatpush1.bf16.msra.mxu0 0
        %1067 = vmatprep.subr.bf16.mxu0 0
        %1068 = vmatpush1.bf16.msra.mxu0 0
        %1069 = vmatprep.subr.bf16.mxu0 0
        %1070 = vmatpush1.bf16.msra.mxu0 0
        %1071 = vmatprep.subr.bf16.mxu0 0
        %1072 = vmatpush1.bf16.msra.mxu0 0
        %1073 = vmatprep.subr.bf16.mxu0 0
        %1074 = vmatpush1.bf16.msra.mxu0 0
        %1075 = vmatprep.subr.bf16.mxu0 0
        %1076 = vmatpush1.bf16.msra.mxu0 0
        %1077 = vmatprep.mubr.bf16.mxu0 0
        %1078 = vmatmul.mubr.bf16.gmra.mrb[0].mxu0 %v1026
        %v1079 = vpop.f32.mrb[0].mxu0
        %v1080 = vadd.f32 0.0, %v1079
        %v1081 = vpop.f32.mrb[0].mxu0
        %v1082 = vpop.f32.mrb[0].mxu0
        %v1083 = vpop.f32.mrb[0].mxu0
        %1084 = vdwg.mxu0
        %1085 = vmatprep.subr.bf16.mxu0 0
        %1086 = vmatpush1.bf16.msra.mxu0 %v1037
        %1087 = vmatprep.subr.bf16.mxu0 0
        %1088 = vmatpush1.bf16.msra.mxu0 %v1038
        %1089 = vmatprep.subr.bf16.mxu0 0
        %1090 = vmatpush1.bf16.msra.mxu0 %v1039
        %1091 = vmatprep.subr.bf16.mxu0 0
        %1092 = vmatpush1.bf16.msra.mxu0 %v1040
        %1093 = vmatprep.subr.bf16.mxu0 0
        %1094 = vmatpush1.bf16.msra.mxu0 %v1041
        %1095 = vmatprep.subr.bf16.mxu0 0
        %1096 = vmatpush1.bf16.msra.mxu0 %v1042
        %1097 = vmatprep.subr.bf16.mxu0 0
        %1098 = vmatpush1.bf16.msra.mxu0 %v1043
        %1099 = vmatprep.subr.bf16.mxu0 0
        %1100 = vmatpush1.bf16.msra.mxu0 %v1044
        %1101 = vmatprep.subr.bf16.mxu0 0
        %1102 = vmatpush1.bf16.msra.mxu0 0
        %1103 = vmatprep.subr.bf16.mxu0 0
        %1104 = vmatpush1.bf16.msra.mxu0 0
        %1105 = vmatprep.subr.bf16.mxu0 0
        %1106 = vmatpush1.bf16.msra.mxu0 0
        %1107 = vmatprep.subr.bf16.mxu0 0
        %1108 = vmatpush1.bf16.msra.mxu0 0
        %1109 = vmatprep.subr.bf16.mxu0 0
        %1110 = vmatpush1.bf16.msra.mxu0 0
        %1111 = vmatprep.subr.bf16.mxu0 0
        %1112 = vmatpush1.bf16.msra.mxu0 0
        %1113 = vmatprep.subr.bf16.mxu0 0
        %1114 = vmatpush1.bf16.msra.mxu0 0
        %1115 = vmatprep.subr.bf16.mxu0 0
        %1116 = vmatpush1.bf16.msra.mxu0 0
        %1117 = vmatprep.mubr.bf16.mxu0 0
        %1118 = vmatmul.mubr.bf16.gmra.mrb[0].mxu0 %v1026
        %v1119 = vpop.f32.mrb[0].mxu0
        %v1120 = vadd.f32 0.0, %v1119
        %v1121 = vpop.f32.mrb[0].mxu0
        %v1122 = vpop.f32.mrb[0].mxu0
        %v1123 = vpop.f32.mrb[0].mxu0
        %1124 = vdwg.mxu0
        %v1127 = vunpack.c.l.s4 1983009808
        %v1128 = vunpack.c.0.s8 %v1127
        %v1129 = vlaneseq
        %v1130 = vshrl.u32 %v1129, 7
        %v1131 = vsub.s32 %v1128, %v1130
        %v1132 = vrot.slane %v1080, %v1131
        %v1133 = vcombine.high %v1132, %v1132
        %v1136 = vmul.f32 %v733, %v1132
        %v1137 = vmul.f32 %v734, %v1133
        %v1140 = vunpack.c.l.s4 1983009808
        %v1141 = vunpack.c.0.s8 %v1140
        %v1142 = vlaneseq
        %v1143 = vshrl.u32 %v1142, 7
        %v1144 = vsub.s32 %v1141, %v1143
        %v1145 = vrot.slane %v1120, %v1144
        %v1146 = vcombine.high %v1145, %v1145
        %v1149 = vmul.f32 %v741, %v1145
        %v1150 = vmul.f32 %v742, %v1146
        %v1151 = vsub.f32 %v1136, %v1149
        %v1152 = vsub.f32 %v1137, %v1150
        %v1153 = vmul.f32 %v733, %v1145
        %v1154 = vmul.f32 %v734, %v1146
        %v1155 = vmul.f32 %v741, %v1132
        %v1156 = vmul.f32 %v742, %v1133
        %v1157 = vadd.f32 %v1153, %v1155
        %v1158 = vadd.f32 %v1154, %v1156
        %v1159 = vld [vmem:[%s516] sm:$0x3]
        %v1160 = vld [vmem:[%s516 + $0x2] sm:$0x3]
        %v1161 = vld [vmem:[%s516 + $0x4] sm:$0x3]
        %v1162 = vld [vmem:[%s516 + $0x6] sm:$0x3]
        %s1163 = scalar_lea.vmem %s516, 8 [#allocation12]
        %v1164 = vld [vmem:[%s1163] sm:$0x3]
        %v1165 = vld [vmem:[%s1163 + $0x2] sm:$0x3]
        %v1166 = vld [vmem:[%s1163 + $0x4] sm:$0x3]
        %v1167 = vld [vmem:[%s1163 + $0x6] sm:$0x3]
        %v1168 = vlaneseq
        %v1169 = vshrl.u32 %v1168, 7
        %v1170 = vsub.s32 0, %v1169
        %v1171 = vrot.slane %v1151, %v1170
        %v1172 = vlaneseq
        %v1173 = vshrl.u32 %v1172, 7
        %v1174 = vsub.s32 0, %v1173
        %v1175 = vrot.slane %v1152, %v1174
        %v1180 = vrot.slane %v1160, 7
        %vm1181 = vcmask 1041409
        %v1182 = vsel %vm1181, %v1180, %v1159
        %v1183 = vrot.slane %v1161, 6
        %vm1184 = vcmask 1042434
        %v1185 = vsel %vm1184, %v1183, %v1182
        %v1186 = vrot.slane %v1162, 5
        %vm1187 = vcmask 1043459
        %v1188 = vsel %vm1187, %v1186, %v1185
        %v1190 = vmul.f32 %v1171, %v1188
        %v1191 = vmul.f32 %v1175, %v1188
        %v1192 = vadd.f32 %v1190, 0.0
        %v1193 = vadd.f32 %v1191, 0.0
        %v1194 = vlaneseq
        %v1195 = vshrl.u32 %v1194, 7
        %v1196 = vsub.s32 0, %v1195
        %v1197 = vrot.slane %v1157, %v1196
        %v1198 = vlaneseq
        %v1199 = vshrl.u32 %v1198, 7
        %v1200 = vsub.s32 0, %v1199
        %v1201 = vrot.slane %v1158, %v1200
        %v1206 = vrot.slane %v1165, 7
        %v1207 = vsel %vm1181, %v1206, %v1164
        %v1208 = vrot.slane %v1166, 6
        %v1209 = vsel %vm1184, %v1208, %v1207
        %v1210 = vrot.slane %v1167, 5
        %v1211 = vsel %vm1187, %v1210, %v1209
        %v1213 = vmul.f32 %v1197, %v1211
        %v1214 = vmul.f32 %v1201, %v1211
        %v1215 = vsub.f32 %v1192, %v1213
        %v1216 = vsub.f32 %v1193, %v1214
        %v1217 = vmul.f32 %v1171, %v1211
        %v1218 = vmul.f32 %v1175, %v1211
        %v1219 = vadd.f32 %v1217, 0.0
        %v1220 = vadd.f32 %v1218, 0.0
        %v1221 = vmul.f32 %v1197, %v1188
        %v1222 = vmul.f32 %v1201, %v1188
        %v1223 = vadd.f32 %v1219, %v1221
        %v1224 = vadd.f32 %v1220, %v1222
        %v1225 = vlaneseq
        %v1226 = vshrl.u32 %v1225, 7
        %v1227 = vsub.s32 1, %v1226
        %v1228 = vrot.slane %v1151, %v1227
        %v1229 = vlaneseq
        %v1230 = vshrl.u32 %v1229, 7
        %v1231 = vsub.s32 1, %v1230
        %v1232 = vrot.slane %v1152, %v1231
        %v1233 = vrot.slane %v1159, 1
        %v1234 = vsel %vm1181, %v1160, %v1233
        %v1235 = vrot.slane %v1161, 7
        %v1236 = vsel %vm1184, %v1235, %v1234
        %v1237 = vrot.slane %v1162, 6
        %v1238 = vsel %vm1187, %v1237, %v1236
        %v1240 = vmul.f32 %v1228, %v1238
        %v1241 = vmul.f32 %v1232, %v1238
        %v1242 = vadd.f32 %v1215, %v1240
        %v1243 = vadd.f32 %v1216, %v1241
        %v1244 = vlaneseq
        %v1245 = vshrl.u32 %v1244, 7
        %v1246 = vsub.s32 1, %v1245
        %v1247 = vrot.slane %v1157, %v1246
        %v1248 = vlaneseq
        %v1249 = vshrl.u32 %v1248, 7
        %v1250 = vsub.s32 1, %v1249
        %v1251 = vrot.slane %v1158, %v1250
        %v1252 = vrot.slane %v1164, 1
        %v1253 = vsel %vm1181, %v1165, %v1252
        %v1254 = vrot.slane %v1166, 7
        %v1255 = vsel %vm1184, %v1254, %v1253
        %v1256 = vrot.slane %v1167, 6
        %v1257 = vsel %vm1187, %v1256, %v1255
        %v1259 = vmul.f32 %v1247, %v1257
        %v1260 = vmul.f32 %v1251, %v1257
        %v1261 = vsub.f32 %v1242, %v1259
        %v1262 = vsub.f32 %v1243, %v1260
        %v1263 = vmul.f32 %v1228, %v1257
        %v1264 = vmul.f32 %v1232, %v1257
        %v1265 = vadd.f32 %v1223, %v1263
        %v1266 = vadd.f32 %v1224, %v1264
        %v1267 = vmul.f32 %v1247, %v1238
        %v1268 = vmul.f32 %v1251, %v1238
        %v1269 = vadd.f32 %v1265, %v1267
        %v1270 = vadd.f32 %v1266, %v1268
        %v1271 = vld [vmem:[%s562] sm:$0xf]
        %v1272 = vld [vmem:[%s562 + $0x4] sm:$0xf]
        %v1273 = vadd.f32 %v1271, %v1261
        %v1274 = vadd.f32 %v1272, %v1262
        %1275 = vst [vmem:[%s562] sm:$0xf] %v1273
        %1276 = vst [vmem:[%s562 + $0x4] sm:$0xf] %v1274
        %s1277 = scalar_lea.vmem %s562, 8 [#allocation13]
        %v1278 = vld [vmem:[%s1277] sm:$0xf]
        %v1279 = vld [vmem:[%s1277 + $0x4] sm:$0xf]
        %v1280 = vadd.f32 %v1278, %v1269
        %v1281 = vadd.f32 %v1279, %v1270
        %1282 = vst [vmem:[%s1277] sm:$0xf] %v1280
        %1283 = vst [vmem:[%s1277 + $0x4] sm:$0xf] %v1281
        %s1284 = sand.u32 %s200, 1
        %s1285 = scalar_lea.sflag [#allocation6], %s1284
        %s1286 = sand.u32 %s200, 1
        %s1287 = smul.addr %s1286, 16
        %s1288 = scalar_lea.vmem [#allocation13], %s1287
        // Predicated region
        $region69: #{tpu_custom_call.1} parent=39 // pred_check
          %p1289 = pneg %p210
        $region70: #{tpu_custom_call.1} parent=39 // pred_check_branch
          %1291 = sbr.rel (%p1289) target = $region72
        $region71: #{tpu_custom_call.1} parent=39 // pred_region
          %s1292 = smul.u32 2, %s35
          %s1294 = ssub.s32 256, 256
          %1295 = vsyncadd %s1285, %s1294
          %s1296 = smul.addr %s34, 4
          %s1297 = sadd.s32 %s1292, %s1296
          %s1298 = smul.addr %s1297, 64
          %s1299 = scalar_lea.hbm %s6, %s1298
          %s1300 = sshll.u32 %s1288, 4
          %s1301 = int_to_ptr.vmem [resolvable:$true] %s1300
          %1306 = dma.vmem_to_hbm [thread:$0]  %s1301, 256, %s1299, %s1285, 64, 64, 4
        $region72: #{tpu_custom_call.1} parent=39 // pred_fallthru
          _
      $region40: #{tpu_custom_call.1} parent=5 // pred_fallthru
        _
      %p1307 = scmp.le.s32.totalorder 2, %s24
      // Predicated region
      $region73: #{tpu_custom_call.1} parent=5 // pred_check
        %p1308 = pneg %p1307
      $region74: #{tpu_custom_call.1} parent=5 // pred_check_branch
        %1310 = sbr.rel (%p1308) target = $region76
      $region75: #{tpu_custom_call.1} parent=5 // pred_region
        %s1311 = ssub.s32 %s24, 2
        // Predicated region
        $region77: #{tpu_custom_call.1} parent=75 // pred_check
          %p1312 = pneg %p216
        $region78: #{tpu_custom_call.1} parent=75 // pred_check_branch
          %1314 = sbr.rel (%p1312) target = $region80
        $region79: #{tpu_custom_call.1} parent=75 // pred_region
          %s1315 = sand.u32 %s201, 1
          %s1316 = scalar_lea.sflag [#allocation6], %s1315
          %s1317 = sand.u32 %s201, 1
          %s1318 = smul.addr %s1317, 16
          %s1319 = scalar_lea.vmem [#allocation13], %s1318
          %1320 = dma.done %s1316, 256
        $region80: #{tpu_custom_call.1} parent=75 // pred_fallthru
          _
      $region76: #{tpu_custom_call.1} parent=5 // pred_fallthru
        _
    $region6: #{tpu_custom_call.1} parent=1 // loop_footer
      %s28 = sadd.s32 1, %s24
    $region7: #{tpu_custom_call.1} parent=1 // loop_footer_branch
      %23 = sbr.rel target = $region3
    $region8: #{tpu_custom_call.1} parent=1 // loop_exit
      _
    %1321 = vsyncpa [#allocation5], 1
    %s1322 = scalar_lea.sflag [#allocation5], 1
    %1323 = vsyncpa %s1322, 1
    %1324 = vsyncpa [#allocation8], 1
    %s1325 = scalar_lea.sflag [#allocation8], 1
    %1326 = vsyncpa %s1325, 1
    %1327 = vsyncpa [#allocation11], 1
    %s1328 = scalar_lea.sflag [#allocation11], 1
    %1329 = vsyncpa %s1328, 1
    %1330 = vsyncpa [#allocation6], 1
    %s1331 = scalar_lea.sflag [#allocation6], 1
    %1332 = vsyncpa %s1331, 1
  %1333 = vsyncmov [#allocation3]
  %s1334 = vpop.sfrf %1333
  %p1335 = scmp.eq.s32.totalorder %s1334, 0
  %p1336 = pneg %p1335
  %1338 = shalt.err (%p1336)

</llo_original>
